<compile_context>
chip_gen: v7x
topology: tpu7x:2x2x1
jax: 0.10.0
libtpu: 0.0.40
codegen_flags: <defaults>
</compile_context>

<pallas_src>
import jax
import jax.numpy as jnp
from jax import lax
from jax.experimental import pallas as pl
from jax.experimental.pallas import tpu as pltpu

HIDDEN = 256
FEAT_DIMS = (256, 512, 1024, 2048)          # resnet50 stage dims (build_backbone)
IMG_FEAT_DIM = sum(FEAT_DIMS)               # 3840
N_GCONV = 10
TK_BOTTLENECK = 1280                        # 3840 = 3 * 1280 K-chunks for the bottleneck


def _round_up(x, m):
    return ((x + m - 1) // m) * m


def _vmem_limit_bytes():
    # v5e/v6e have 128 MiB VMEM per TensorCore, v7x only 64 MiB: never request more
    # than physical capacity minus headroom.
    try:
        cap = int(pltpu.get_tpu_info().vmem_capacity_bytes)
    except Exception:
        cap = 64 << 20  # conservative (v7x) default
    return max(32 << 20, min(cap - (8 << 20), 96 << 20))


# ---------------------------------------------------------------------------
# Kernel A: bottleneck  h = relu(feats @ Wb + bb)   (tiled over rows and K)
# ---------------------------------------------------------------------------
def _bottleneck_kernel(feats_ref, wb_ref, bb_ref, h_ref, acc_ref):
    k = pl.program_id(1)

    @pl.when(k == 0)
    def _():
        acc_ref[...] = jnp.zeros_like(acc_ref)

    acc_ref[...] += jnp.dot(feats_ref[...], wb_ref[...],
                            preferred_element_type=jnp.float32)

    @pl.when(k == pl.num_programs(1) - 1)
    def _():
        h_ref[...] = jnp.maximum(acc_ref[...] + bb_ref[...], 0.0).astype(h_ref.dtype)


def bottleneck_pallas(feats2d, wb_bf16, bb_f32, vmem_limit):
    n_rows, kf = feats2d.shape
    tm = 256 if n_rows % 256 == 0 else 128
    tk = TK_BOTTLENECK
    assert kf % tk == 0 and n_rows % tm == 0

    return pl.pallas_call(
        _bottleneck_kernel,
        grid=(n_rows // tm, kf // tk),
        out_shape=jax.ShapeDtypeStruct((n_rows, HIDDEN), jnp.bfloat16),
        in_specs=[
            pl.BlockSpec((tm, tk), lambda i, k: (i, k)),
            pl.BlockSpec((tk, HIDDEN), lambda i, k: (k, 0)),
            pl.BlockSpec((1, HIDDEN), lambda i, k: (0, 0)),
        ],
        out_specs=pl.BlockSpec((tm, HIDDEN), lambda i, k: (i, 0)),
        scratch_shapes=[pltpu.VMEM((tm, HIDDEN), jnp.float32)],
        compiler_params=pltpu.CompilerParams(
            dimension_semantics=("parallel", "arbitrary"),
            vmem_limit_bytes=vmem_limit,
        ),
    )(feats2d, wb_bf16, bb_f32)


# ---------------------------------------------------------------------------
# Kernel B (one grid step = one packed mesh tile):
#   concat(verts) -> 10x GraphConv -> vert_offset + asym_conf heads
# ---------------------------------------------------------------------------
def _gconv_head_kernel(
    h_ref,                           # (T, H)    bf16  bottlenecked vert features
    verts_ref,                       # (T, 3)    f32   raw verts (concat input of gconv0)
    adj_ref,                         # (1, T, T) bf16  block-diagonal packed adjacency
    g0w0f_ref, g0w0v_ref, g0b0_ref,  # gconv0 self weights split [feat | vert]
    g0w1f_ref, g0w1v_ref, g0b1_ref,  # gconv0 neighbor weights split
    gw0_ref, gb0_ref,                # gconvs 1..9 self:     (9, H, H) bf16, (9, 1, H) f32
    gw1_ref, gb1_ref,                # gconvs 1..9 neighbor: (9, H, H) bf16, (9, 1, H) f32
    wa1_ref, ba1_ref,                # asym MLP layer 1 (H, H) bf16
    wa2_ref, ba2_ref,                # asym MLP layer 2 padded to (H, 128)
    wa3_ref, ba3_ref,                # asym MLP layer 3 padded to (128, 128)
    whx_ref,                         # packed head from x:  wo in cols 0:3 of (H, 128) bf16
    wha_ref,                         # packed head from a:  wa4 in rows 0:32, col 3, bf16
    bh_ref,                          # merged head bias (1, 128) f32
    out_ref,                         # (T, 128)  f32   cols 0:3 delta, col 3 sigmoid(conf)
):
    f32 = jnp.float32
    bf16 = jnp.bfloat16

    h_bf = h_ref[...]                        # (T, H) bf16
    verts = verts_ref[...]                   # (T, 3) f32
    adj = adj_ref[0]                         # (T, T) bf16

    # gconv0 on concat([h, verts]) in split-weight form.  The K=3 verts part is a
    # VPU broadcast-MAC; the lane-broadcasts are hoisted and reused for w0 and w1.
    v0 = verts[:, 0:1]
    v1 = verts[:, 1:2]
    v2 = verts[:, 2:3]

    def verts_proj(w_ref):
        w = w_ref[...]                       # (3, H) f32
        return v0 * w[0:1, :] + v1 * w[1:2, :] + v2 * w[2:3, :]

    w0x = (jnp.dot(h_bf, g0w0f_ref[...], preferred_element_type=f32)
           + verts_proj(g0w0v_ref) + g0b0_ref[...])
    w1x = (jnp.dot(h_bf, g0w1f_ref[...], preferred_element_type=f32)
           + verts_proj(g0w1v_ref) + g0b1_ref[...])
    # TODO(synk): neighbor-gather / segment-sum instead of dense per-tile adjacency
    # matmul (O(T^2 H) on ~6 nnz/row) -- kept dense; mesh packing already shrinks T.
    x = jnp.maximum(
        w0x + jnp.dot(adj, w1x.astype(bf16), preferred_element_type=f32), 0.0)

    # gconvs 1..9 via fori_loop with dynamic weight indexing (bounded live ranges)
    def gconv_body(i, x_cur):
        x_bf = x_cur.astype(bf16)
        s0 = jnp.dot(x_bf, gw0_ref[i], preferred_element_type=f32) + gb0_ref[i]
        s1 = jnp.dot(x_bf, gw1_ref[i], preferred_element_type=f32) + gb1_ref[i]
        return jnp.maximum(
            s0 + jnp.dot(adj, s1.astype(bf16), preferred_element_type=f32), 0.0)

    x = lax.fori_loop(0, N_GCONV - 1, gconv_body, x)

    # asym_conf MLP (hidden widths zero-padded to 128 lanes in the wrapper)
    x_bf = x.astype(bf16)
    a = jnp.maximum(
        jnp.dot(x_bf, wa1_ref[...], preferred_element_type=f32) + ba1_ref[...], 0.0)
    a = jnp.maximum(
        jnp.dot(a.astype(bf16), wa2_ref[...], preferred_element_type=f32) + ba2_ref[...], 0.0)
    a = jnp.maximum(
        jnp.dot(a.astype(bf16), wa3_ref[...], preferred_element_type=f32) + ba3_ref[...], 0.0)

    # lane-dense packed head: cols 0:3 = vert_offset(x), col 3 = asym_conf logit
    # (bf16 operands + weights, f32 accumulation, merged bias)
    packed = (jnp.dot(x_bf, whx_ref[...], preferred_element_type=f32)
              + jnp.dot(a.astype(bf16), wha_ref[...], preferred_element_type=f32)
              + bh_ref[...])

    # exact numerically-stable sigmoid applied only to the conf column (col == 3)
    ex = jnp.exp(-jnp.abs(packed))
    sig = jnp.where(packed >= 0, 1.0 / (1.0 + ex), ex / (1.0 + ex))
    col = lax.broadcasted_iota(jnp.int32, packed.shape, 1)
    out_ref[...] = jnp.where(col == 3, sig, packed)


_WEIGHT_ORDER = ['g0w0f', 'g0w0v', 'g0b0', 'g0w1f', 'g0w1v', 'g0b1',
                 'gw0', 'gb0', 'gw1', 'gb1',
                 'wa1', 'ba1', 'wa2', 'ba2', 'wa3', 'ba3',
                 'whx', 'wha', 'bh']


def gconv_head_pallas(kp, h, verts2d, adj, vmem_limit):
    """h: (Np, H) bf16; verts2d: (Np, 3) f32; adj: (n_tiles, T, T) bf16."""
    n_rows, _ = h.shape
    n_tiles, t, _ = adj.shape
    assert n_rows == n_tiles * t

    def whole(arr):
        nd = arr.ndim
        return pl.BlockSpec(arr.shape, lambda i, _nd=nd: (0,) * _nd)

    weights = [kp[k] for k in _WEIGHT_ORDER]

    in_specs = [
        pl.BlockSpec((t, HIDDEN), lambda i: (i, 0)),
        pl.BlockSpec((t, 3), lambda i: (i, 0)),
        pl.BlockSpec((1, t, t), lambda i: (i, 0, 0)),
    ] + [whole(w) for w in weights]

    return pl.pallas_call(
        _gconv_head_kernel,
        grid=(n_tiles,),
        out_shape=jax.ShapeDtypeStruct((n_rows, 128), jnp.float32),
        in_specs=in_specs,
        out_specs=pl.BlockSpec((t, 128), lambda i: (i, 0)),
        compiler_params=pltpu.CompilerParams(
            dimension_semantics=("parallel",),
            vmem_limit_bytes=vmem_limit,
        ),
    )(h, verts2d, adj, *weights)


# ---------------------------------------------------------------------------
# Plain-JAX glue (backbone stand-in, vertex alignment, vert_align sampling,
# mesh packing, adjacency)
# ---------------------------------------------------------------------------
def standin_backbone(proj_params, images):
    # TODO(synk): real module uses a ResNet50 backbone; replaced with a deterministic
    # stand-in (avg-resize + 1x1 channel projection) producing the same feat_dims.
    b, c, h, w = images.shape
    feats = []
    for proj, stride in zip(proj_params, (4, 8, 16, 32)):
        hh, ww = max(h // stride, 1), max(w // stride, 1)
        pooled = jax.image.resize(images, (b, c, hh, ww), method='linear')
        feats.append(jnp.einsum('bchw,cd->bdhw', pooled, proj))
    return feats


def align_and_normalize_verts(verts_padded, poses):
    # TODO(synk): coords.align_and_normalize_verts_original is project-specific and
    # unavailable; approximated with per-mesh centering + scaling into [-1, 1].
    del poses
    vmax = verts_padded.max(axis=1, keepdims=True)
    vmin = verts_padded.min(axis=1, keepdims=True)
    center = (vmax + vmin) / 2.0
    scale = jnp.maximum((vmax - vmin).max(axis=-1, keepdims=True) / 2.0, 1e-6)
    return (verts_padded - center) / scale


def _grid_sample_bilinear(feat, grid):
    # feat: (B, C, H, W); grid: (B, V, 2) with xy in [-1, 1]; align_corners=True, zeros padding
    b, c, h, w = feat.shape
    x = (grid[..., 0] + 1.0) * (w - 1) / 2.0
    y = (grid[..., 1] + 1.0) * (h - 1) / 2.0
    x0 = jnp.floor(x)
    y0 = jnp.floor(y)
    x1, y1 = x0 + 1.0, y0 + 1.0
    wx1, wy1 = x - x0, y - y0
    wx0, wy0 = 1.0 - wx1, 1.0 - wy1

    def gather(xi, yi):
        valid = (xi >= 0) & (xi <= w - 1) & (yi >= 0) & (yi <= h - 1)
        xc = jnp.clip(xi, 0, w - 1).astype(jnp.int32)
        yc = jnp.clip(yi, 0, h - 1).astype(jnp.int32)
        g = jax.vmap(lambda f, yy, xx: f[:, yy, xx])(feat, yc, xc)  # (B, C, V)
        return g * valid[:, None, :].astype(feat.dtype)

    out = (gather(x0, y0) * (wx0 * wy0)[:, None, :]
           + gather(x1, y0) * (wx1 * wy0)[:, None, :]
           + gather(x0, y1) * (wx0 * wy1)[:, None, :]
           + gather(x1, y1) * (wx1 * wy1)[:, None, :])
    return jnp.transpose(out, (0, 2, 1))  # (B, V, C)


def vert_align_batched(feat_maps, verts_padded):
    grid = verts_padded[..., :2]
    sampled = [_grid_sample_bilinear(f, grid) for f in feat_maps]
    return jnp.concatenate(sampled, axis=2)        # (B, V, IMG_FEAT_DIM)


def tile_geometry(b, v):
    """Pack as many whole meshes as fit in a ~256-row tile (zero row waste when
    V divides the tile); large meshes get one tile each rounded to 128 rows."""
    if v <= 256:
        mpt = min(b, max(1, 256 // v))
    else:
        mpt = 1
    t = _round_up(mpt * v, 128)
    n_tiles = -(-b // mpt)
    return mpt, t, n_tiles


def pack_rows(x, b, v, mpt, t, n_tiles):
    """x: (B, V, C) -> (n_tiles*T, C): meshes packed mpt-per-tile, padded rows zero."""
    b_pad = n_tiles * mpt
    c = x.shape[-1]
    xp = jnp.zeros((b_pad, v, c), x.dtype).at[:b].set(x)
    xp = xp.reshape(n_tiles, mpt * v, c)
    pad = t - mpt * v
    if pad:
        xp = jnp.pad(xp, ((0, 0), (0, pad), (0, 0)))
    return xp.reshape(n_tiles * t, c)


def packed_adjacency(edges_packed, b, v, mpt, t, n_tiles):
    # Assumes equal vertex counts per mesh (packed index = b*V + local) and that
    # edges_packed lists each undirected edge once (pytorch3d convention).
    mesh_id = edges_packed[:, 0] // v
    i_loc = edges_packed[:, 0] % v
    j_loc = edges_packed[:, 1] % v
    tile = mesh_id // mpt
    slot = mesh_id % mpt
    ri = slot * v + i_loc
    rj = slot * v + j_loc
    a = jnp.zeros((n_tiles, t, t), jnp.float32)
    a = a.at[tile, ri, rj].add(1.0)
    a = a.at[tile, rj, ri].add(1.0)
    return a.astype(jnp.bfloat16)


# ---------------------------------------------------------------------------
# Parameters (deterministic synthetic init matching the module's layer shapes)
# ---------------------------------------------------------------------------
def init_params(key):
    keys = jax.random.split(key, 32)
    it = iter(keys)

    def w(shape, scale=0.05):
        return scale * jax.random.normal(next(it), shape, jnp.float32)

    p = {}
    p['backbone_proj'] = [w((3, c)) for c in FEAT_DIMS]
    p['wb'], p['bb'] = w((IMG_FEAT_DIM, HIDDEN)), w((1, HIDDEN), 0.01)
    # gconv 0: input dim = HIDDEN + 3 (concat of bottleneck feats and verts_packed)
    p['g0_w0f'], p['g0_w0v'], p['g0_b0'] = w((HIDDEN, HIDDEN)), w((3, HIDDEN)), w((1, HIDDEN), 0.01)
    p['g0_w1f'], p['g0_w1v'], p['g0_b1'] = w((HIDDEN, HIDDEN)), w((3, HIDDEN)), w((1, HIDDEN), 0.01)
    # gconvs 1..9 stacked
    p['gw0'], p['gb0'] = w((N_GCONV - 1, HIDDEN, HIDDEN)), w((N_GCONV - 1, 1, HIDDEN), 0.01)
    p['gw1'], p['gb1'] = w((N_GCONV - 1, HIDDEN, HIDDEN)), w((N_GCONV - 1, 1, HIDDEN), 0.01)
    p['wo'], p['bo'] = w((HIDDEN, 3)), w((1, 3), 0.01)
    p['wa1'], p['ba1'] = w((HIDDEN, HIDDEN)), w((1, HIDDEN), 0.01)
    p['wa2'], p['ba2'] = w((HIDDEN, 64)), w((1, 64), 0.01)
    p['wa3'], p['ba3'] = w((64, 32)), w((1, 32), 0.01)
    p['wa4'], p['ba4'] = w((32, 1)), w((1, 1), 0.01)
    return p


def prep_kernel_params(p):
    """bf16 for all MXU weights, f32 for biases/small vert weights; pad narrow MLP
    layers to 128 lanes and pack the two heads into lane-dense (·, 128) projections."""
    bf = jnp.bfloat16
    kp = {}
    kp['wb'], kp['bb'] = p['wb'].astype(bf), p['bb']
    kp['g0w0f'], kp['g0w0v'], kp['g0b0'] = p['g0_w0f'].astype(bf), p['g0_w0v'], p['g0_b0']
    kp['g0w1f'], kp['g0w1v'], kp['g0b1'] = p['g0_w1f'].astype(bf), p['g0_w1v'], p['g0_b1']
    kp['gw0'], kp['gb0'] = p['gw0'].astype(bf), p['gb0']
    kp['gw1'], kp['gb1'] = p['gw1'].astype(bf), p['gb1']
    kp['wa1'], kp['ba1'] = p['wa1'].astype(bf), p['ba1']
    # pad asym MLP hidden widths (64, 32) to 128 lanes; padded lanes stay exactly 0
    kp['wa2'] = jnp.zeros((HIDDEN, 128), jnp.float32).at[:, :64].set(p['wa2']).astype(bf)
    kp['ba2'] = jnp.zeros((1, 128), jnp.float32).at[:, :64].set(p['ba2'])
    kp['wa3'] = jnp.zeros((128, 128), jnp.float32).at[:64, :32].set(p['wa3']).astype(bf)
    kp['ba3'] = jnp.zeros((1, 128), jnp.float32).at[:, :32].set(p['ba3'])
    # packed lane-dense heads (bf16): delta_v in cols 0:3 (from x), conf logit in col 3 (from a)
    kp['whx'] = jnp.zeros((HIDDEN, 128), jnp.float32).at[:, 0:3].set(p['wo']).astype(bf)
    kp['wha'] = jnp.zeros((128, 128), jnp.float32).at[0:32, 3:4].set(p['wa4']).astype(bf)
    kp['bh'] = (jnp.zeros((1, 128), jnp.float32)
                .at[:, 0:3].set(p['bo'])
                .at[:, 3:4].set(p['ba4']))
    return kp


# ---------------------------------------------------------------------------
# Full forward (asym=True → returns [delta_v, asym_conf_scores])
# ---------------------------------------------------------------------------
def forward(params, image, pose, verts_padded, edges_packed):
    b, v, _ = verts_padded.shape
    mpt, t, n_tiles = tile_geometry(b, v)
    b_pad = n_tiles * mpt

    feat_maps = standin_backbone(params['backbone_proj'], image)
    aligned_verts = align_and_normalize_verts(verts_padded, pose)
    # vert_align features produced directly in bf16 (no extra f32 HBM roundtrip)
    vert_feats = vert_align_batched(feat_maps, aligned_verts).astype(jnp.bfloat16)

    # pack meshes into row tiles: zero feats / zero adjacency rows & cols for padding,
    # so padded rows never contribute to real vertices' neighbor sums.
    feats2d = pack_rows(vert_feats, b, v, mpt, t, n_tiles)          # (Np, 3840) bf16
    verts2d = pack_rows(verts_padded, b, v, mpt, t, n_tiles)        # (Np, 3)    f32
    adj = packed_adjacency(edges_packed, b, v, mpt, t, n_tiles)     # (n_tiles, T, T) bf16

    kp = prep_kernel_params(params)
    vmem_limit = _vmem_limit_bytes()

    h = bottleneck_pallas(feats2d, kp['wb'], kp['bb'], vmem_limit)  # (Np, 256) bf16
    packed = gconv_head_pallas(kp, h, verts2d, adj, vmem_limit)     # (Np, 128) f32

    out = (packed.reshape(n_tiles, t, 128)[:, :mpt * v, :]
           .reshape(b_pad, v, 128)[:b])
    delta_v = out[..., 0:3].reshape(b * v, 3)
    asym_conf = out[..., 3:4].reshape(b * v, 1)
    return [delta_v, asym_conf]


if __name__ == "__main__":
    key = jax.random.PRNGKey(0)
    k_img, k_verts, k_params = jax.random.split(key, 3)

    B, V, IMG = 2, 64, 32
    image = jax.random.normal(k_img, (B, 3, IMG, IMG), jnp.float32)
    pose = jnp.array([[2.0, 30.0, 45.0], [2.5, 10.0, -60.0]], jnp.float32)  # dist, elev, azim
    verts_padded = jax.random.normal(k_verts, (B, V, 3), jnp.float32)

    # simple ring-mesh connectivity, packed indices over the batch (each edge once)
    ids = jnp.arange(V, dtype=jnp.int32)
    ring = jnp.stack([ids, (ids + 1) % V], axis=1)                           # (V, 2)
    edges_packed = jnp.concatenate([ring + bi * V for bi in range(B)], axis=0)

    params = init_params(k_params)

    delta_v, asym_conf = forward(params, image, pose, verts_padded, edges_packed)
    jax.block_until_ready((delta_v, asym_conf))

    assert delta_v.shape == (B * V, 3) and delta_v.dtype == jnp.float32
    assert asym_conf.shape == (B * V, 1) and asym_conf.dtype == jnp.float32
    assert bool(jnp.all(jnp.isfinite(delta_v)))
    assert bool(jnp.all((asym_conf >= 0) & (asym_conf <= 1)))
    print("KERNEL_OK")
</pallas_src>

<mosaic_0001>
module attributes {stable_mosaic.version = 11 : i64} {
  func.func @_bottleneck_kernel(%arg0: i32, %arg1: i32, %arg2: memref<128x1280xbf16, #tpu.memory_space<vmem>>, %arg3: memref<1280x256xbf16, #tpu.memory_space<vmem>>, %arg4: memref<1x256xf32, #tpu.memory_space<vmem>>, %arg5: memref<128x256xbf16, #tpu.memory_space<vmem>>, %arg6: memref<128x256xf32, #tpu.memory_space<vmem>>) attributes {dimension_semantics = [#tpu.dimension_semantics<parallel>, #tpu.dimension_semantics<arbitrary>], iteration_bounds = array<i64: 1, 3>, scalar_prefetch = 0 : i64, scratch_operands = 1 : i64, tpu.core_type = #tpu.core_type<tc>, window_params = [{transform_indices = @transform_0, window_bounds = array<i64: 128, 1280>}, {transform_indices = @transform_1, window_bounds = array<i64: 1280, 256>}, {pipeline_mode = #tpu.pipeline_mode<synchronous>, transform_indices = @transform_2, window_bounds = array<i64: 1, 256>}, {transform_indices = @transform_3, window_bounds = array<i64: 128, 256>}]} {
    %c0_i32 = arith.constant 0 : i32
    %0 = arith.cmpi eq, %arg1, %c0_i32 : i32
    %1 = arith.extui %0 : i1 to i32
    %c0_i32_0 = arith.constant 0 : i32
    %2 = arith.cmpi ne, %1, %c0_i32_0 : i32
    scf.if %2 {
      %cst_9 = arith.constant 0.000000e+00 : f32
      %12 = vector.broadcast %cst_9 : f32 to vector<128x256xf32>
      %c0_10 = arith.constant 0 : index
      %c0_11 = arith.constant 0 : index
      %13 = vector.load %arg6[%c0_10, %c0_11] : memref<128x256xf32, #tpu.memory_space<vmem>>, vector<128x256xf32>
      tpu.vector_store %arg6[%c0_10, %c0_11], %12 {strides = array<i32>} : memref<128x256xf32, #tpu.memory_space<vmem>>, vector<128x256xf32>,
    } else {
    }
    %c0 = arith.constant 0 : index
    %c0_1 = arith.constant 0 : index
    %3 = vector.load %arg6[%c0, %c0_1] : memref<128x256xf32, #tpu.memory_space<vmem>>, vector<128x256xf32>
    %c0_2 = arith.constant 0 : index
    %c0_3 = arith.constant 0 : index
    %4 = vector.load %arg2[%c0_2, %c0_3] : memref<128x1280xbf16, #tpu.memory_space<vmem>>, vector<128x1280xbf16>
    %c0_4 = arith.constant 0 : index
    %c0_5 = arith.constant 0 : index
    %5 = vector.load %arg3[%c0_4, %c0_5] : memref<1280x256xbf16, #tpu.memory_space<vmem>>, vector<1280x256xbf16>
    %cst = arith.constant dense<0.000000e+00> : vector<128x256xf32>
    %6 = tpu.matmul %4, %5, %cst {dimension_numbers = #tpu.dot_dimension_numbers<[1], [0], [0], [1], [0, 0, 1, 1], [], []>} : vector<128x1280xbf16>, vector<1280x256xbf16>, vector<128x256xf32> -> vector<128x256xf32>
    %7 = arith.addf %3, %6 : vector<128x256xf32>
    %c0_6 = arith.constant 0 : index
    %c0_7 = arith.constant 0 : index
    %8 = vector.load %arg6[%c0_6, %c0_7] : memref<128x256xf32, #tpu.memory_space<vmem>>, vector<128x256xf32>
    tpu.vector_store %arg6[%c0_6, %c0_7], %7 {strides = array<i32>} : memref<128x256xf32, #tpu.memory_space<vmem>>, vector<128x256xf32>,
    %c2_i32 = arith.constant 2 : i32
    %9 = arith.cmpi eq, %arg1, %c2_i32 : i32
    %10 = arith.extui %9 : i1 to i32
    %c0_i32_8 = arith.constant 0 : i32
    %11 = arith.cmpi ne, %10, %c0_i32_8 : i32
    scf.if %11 {
      %c0_9 = arith.constant 0 : index
      %c0_10 = arith.constant 0 : index
      %12 = vector.load %arg6[%c0_9, %c0_10] : memref<128x256xf32, #tpu.memory_space<vmem>>, vector<128x256xf32>
      %c0_11 = arith.constant 0 : index
      %c0_12 = arith.constant 0 : index
      %13 = vector.load %arg4[%c0_11, %c0_12] : memref<1x256xf32, #tpu.memory_space<vmem>>, vector<1x256xf32>
      %14 = vector.broadcast %13 : vector<1x256xf32> to vector<128x256xf32>
      %15 = arith.addf %12, %14 : vector<128x256xf32>
      %cst_13 = arith.constant 0.000000e+00 : f32
      %16 = vector.broadcast %cst_13 : f32 to vector<128x256xf32>
      %17 = arith.maximumf %15, %16 : vector<128x256xf32>
      %18 = arith.truncf %17 : vector<128x256xf32> to vector<128x256xbf16>
      %c0_14 = arith.constant 0 : index
      %c0_15 = arith.constant 0 : index
      %19 = vector.load %arg5[%c0_14, %c0_15] : memref<128x256xbf16, #tpu.memory_space<vmem>>, vector<128x256xbf16>
      tpu.vector_store %arg5[%c0_14, %c0_15], %18 {strides = array<i32>} : memref<128x256xbf16, #tpu.memory_space<vmem>>, vector<128x256xbf16>,
    } else {
    }
    return
  }
  func.func @transform_0(%arg0: i32, %arg1: i32) -> (i32, i32) {
    %c0_i32 = arith.constant 0 : i32
    return %arg0, %arg1 : i32, i32
  }
  func.func @transform_1(%arg0: i32, %arg1: i32) -> (i32, i32) {
    %c0_i32 = arith.constant 0 : i32
    %c0_i32_0 = arith.constant 0 : i32
    return %arg1, %c0_i32 : i32, i32
  }
  func.func @transform_2(%arg0: i32, %arg1: i32) -> (i32, i32) {
    %c0_i32 = arith.constant 0 : i32
    %c0_i32_0 = arith.constant 0 : i32
    %c0_i32_1 = arith.constant 0 : i32
    return %c0_i32, %c0_i32_0 : i32, i32
  }
  func.func @transform_3(%arg0: i32, %arg1: i32) -> (i32, i32) {
    %c0_i32 = arith.constant 0 : i32
    %c0_i32_0 = arith.constant 0 : i32
    return %arg0, %c0_i32 : i32, i32
  }
}

</mosaic_0001>

<llo_original>
// kernel: tpu_custom_call.1
$region0: #{tpu_custom_call.1}
  #allocation0 [shape = 'u32[]', space=smem, size = 0x4, offset = 0x4, fixed_abs, tag = 'smem constant byte address 0x4 - core index']
  #allocation1 [shape = 'u32[144,128]{1,0:T(1,128)}', space=vmem, size = 0x12000, scoped, tag = 'internal scratch']
  #allocation2 [shape = 'f32[128,256]{1,0:T(8,128)}', space=vmem, size = 0x20000, scoped, tag = 'scratch operand']
  %s0 = inlined_call_operand.hbm [shape: bf16[128,3840], index: 0, kind: input, shape index: {}]
  %s1 = inlined_call_operand.hbm [shape: bf16[3840,256], index: 1, kind: input, shape index: {}]
  %s2 = inlined_call_operand.hbm [shape: f32[1,256], index: 2, kind: input, shape index: {}]
  %s3 = inlined_call_operand.hbm [shape: bf16[128,256], index: 3, kind: output, shape index: {}]
  %s4 = sld [smem:[#allocation0]]
  $region65: #{tpu_custom_call.1} parent=0
    _
  %s6 = ssub.s32 1, %s4
  %s7 = scalar_select 0, %s6, %s4
  $region1: #{tpu_custom_call.1} parent=0
    #allocation3 [shape = 'u8[655360]{0}', space=vmem, size = 0xa0000, scoped, tag = 'input window, operand 0']
    #allocation4 [shape = 's32[2]{0}', space=sflag, size = 0x8, scoped, tag = 'scoped memory for tpu_custom_call.1']
    #allocation5 [shape = 's32[2]{0}', space=sflag, size = 0x8, scoped, tag = 'scoped memory for tpu_custom_call.1']
    #allocation6 [shape = 'u8[1310720]{0}', space=vmem, size = 0x140000, scoped, tag = 'input window, operand 1']
    #allocation7 [shape = 's32[2]{0}', space=sflag, size = 0x8, scoped, tag = 'scoped memory for tpu_custom_call.1']
    #allocation8 [shape = 'u8[1024]{0}', space=vmem, size = 0x400, scoped, tag = 'input window, operand 2, single buffered']
    #allocation9 [shape = 'u8[65536]{0}', space=vmem, size = 0x10000, scoped, tag = 'output window, operand 0, single buffered']
    %8 = vsyncpa [#allocation4], 0
    %s9 = scalar_lea.sflag [#allocation4], 1
    %10 = vsyncpa %s9, 0
    %11 = vsyncpa [#allocation7], 0
    %s12 = scalar_lea.sflag [#allocation7], 1
    %13 = vsyncpa %s12, 0
    %14 = vsyncpa [#allocation5], 0
    loop: start=0, step=1, limit=5
    $region2: #{tpu_custom_call.1} parent=1 // loop_pre_header
      _
    $region3: #{tpu_custom_call.1} parent=1 // loop_header
      %s16 = sphi 0, %s20
      %p17 = scmp.ge.s32.totalorder %s16, 5
      %s23 = sphi 0, %s35
      %s24 = sphi 0, %s31
      %s25 = sphi 0, %s23
      %s26 = sphi 0, %s24
      %s27 = sphi 0, %s25
      %s28 = sphi 0, %s26
      %s40 = sphi 0, %s42
      %s43 = sphi 0, %s40
      %s44 = sphi 0, %s43
      %s60 = sphi 0, %s44
      %s66 = sphi 0, %s68
      %s69 = sphi 0, %s66
      %s70 = sphi 0, %s69
      %s86 = sphi 0, %s70
      %s90 = sphi 0, %s90
      %s92 = sphi 0, %s90
      %s93 = sphi 0, %s92
      %s107 = sphi 0, %s93
      %s113 = sphi 0, %s115
      %s116 = sphi 0, %s113
      %s117 = sphi 0, %s116
      %s133 = sphi 0, %s117
    $region4: #{tpu_custom_call.1} parent=1 // loop_header_branch
      %19 = sbr.rel (%p17) target = $region8
    $region5: #{tpu_custom_call.1} parent=1 // loop_body
      %s21 = ssub.s32 %s16, 1
      %s22 = ssub.s32 %s16, 2
      %s29 = sadd.s32 1, %s24
      %p30 = scmp.ge.s32.totalorder %s29, 3
      %s31 = scalar_select %p30, 0, %s29
      %s32 = sadd.s32 1, %s23
      %s33 = scalar_select %p30, %s32, %s23
      %p34 = scmp.ge.s32.totalorder %s33, 1
      %s35 = scalar_select %p34, 0, %s33
      %s36 = ssub.s32 %s23, %s35
      %s37 = ssub.s32 %s24, %s31
      %s38 = sor.u32 %s36, %s37
      %p39 = scmp.eq.s32.totalorder %s38, 0
      %s41 = sadd.s32 %s40, 1
      %s42 = scalar_select %p39, %s40, %s41
      %p45 = pneg %p39
      %p46 = scmp.eq.s32.totalorder %s16, 2
      %p47 = por %p45, %p46
      %p48 = scmp.ne.s32.totalorder %s40, %s43
      %p49 = scmp.eq.s32.totalorder %s16, 0
      %p50 = por %p48, %p49
      %p51 = scmp.ne.s32.totalorder %s40, %s43
      %p52 = scmp.eq.s32.totalorder %s21, 2
      %p53 = por %p51, %p52
      %p54 = scmp.ne.s32.totalorder %s43, %s44
      %p55 = scmp.eq.s32.totalorder %s21, 0
      %p56 = por %p54, %p55
      %p57 = scmp.ne.s32.totalorder %s43, %s44
      %p58 = scmp.eq.s32.totalorder %s22, 2
      %p59 = por %p57, %p58
      %p61 = scmp.ne.s32.totalorder %s44, %s60
      %p62 = scmp.eq.s32.totalorder %s22, 0
      %p63 = por %p61, %p62
      %s64 = ssub.s32 %s24, %s31
      %p65 = scmp.eq.s32.totalorder %s64, 0
      %s67 = sadd.s32 %s66, 1
      %s68 = scalar_select %p65, %s66, %s67
      %p71 = pneg %p65
      %p72 = scmp.eq.s32.totalorder %s16, 2
      %p73 = por %p71, %p72
      %p74 = scmp.ne.s32.totalorder %s66, %s69
      %p75 = scmp.eq.s32.totalorder %s16, 0
      %p76 = por %p74, %p75
      %p77 = scmp.ne.s32.totalorder %s66, %s69
      %p78 = scmp.eq.s32.totalorder %s21, 2
      %p79 = por %p77, %p78
      %p80 = scmp.ne.s32.totalorder %s69, %s70
      %p81 = scmp.eq.s32.totalorder %s21, 0
      %p82 = por %p80, %p81
      %p83 = scmp.ne.s32.totalorder %s69, %s70
      %p84 = scmp.eq.s32.totalorder %s22, 2
      %p85 = por %p83, %p84
      %p87 = scmp.ne.s32.totalorder %s70, %s86
      %p88 = scmp.eq.s32.totalorder %s22, 0
      %p89 = por %p87, %p88
      %s91 = sadd.s32 %s90, 1
      %p94 = scmp.eq.s32.totalorder %s16, 2
      %p95 = scmp.ne.s32.totalorder %s90, %s92
      %p96 = scmp.eq.s32.totalorder %s16, 0
      %p97 = por %p95, %p96
      %p98 = scmp.ne.s32.totalorder %s90, %s92
      %p99 = scmp.eq.s32.totalorder %s21, 2
      %p100 = por %p98, %p99
      %p101 = scmp.ne.s32.totalorder %s92, %s93
      %p102 = scmp.eq.s32.totalorder %s21, 0
      %p103 = por %p101, %p102
      %p104 = scmp.ne.s32.totalorder %s92, %s93
      %p105 = scmp.eq.s32.totalorder %s22, 2
      %p106 = por %p104, %p105
      %p108 = scmp.ne.s32.totalorder %s93, %s107
      %p109 = scmp.eq.s32.totalorder %s22, 0
      %p110 = por %p108, %p109
      %s111 = ssub.s32 %s23, %s35
      %p112 = scmp.eq.s32.totalorder %s111, 0
      %s114 = sadd.s32 %s113, 1
      %s115 = scalar_select %p112, %s113, %s114
      %p118 = pneg %p112
      %p119 = scmp.eq.s32.totalorder %s16, 2
      %p120 = por %p118, %p119
      %p121 = scmp.ne.s32.totalorder %s113, %s116
      %p122 = scmp.eq.s32.totalorder %s16, 0
      %p123 = por %p121, %p122
      %p124 = scmp.ne.s32.totalorder %s113, %s116
      %p125 = scmp.eq.s32.totalorder %s21, 2
      %p126 = por %p124, %p125
      %p127 = scmp.ne.s32.totalorder %s116, %s117
      %p128 = scmp.eq.s32.totalorder %s21, 0
      %p129 = por %p127, %p128
      %p130 = scmp.ne.s32.totalorder %s116, %s117
      %p131 = scmp.eq.s32.totalorder %s22, 2
      %p132 = por %p130, %p131
      %p134 = scmp.ne.s32.totalorder %s117, %s133
      %p135 = scmp.eq.s32.totalorder %s22, 0
      %p136 = por %p134, %p135
      %p137 = scmp.le.s32.totalorder 1, %s16
      %p138 = scmp.lt.s32.totalorder %s16, 4
      %p139 = pnand %p137, %p138
      %p140 = pneg %p139
      // Predicated region
      $region9: #{tpu_custom_call.1} parent=5 // pred_check
        _
      $region10: #{tpu_custom_call.1} parent=5 // pred_check_branch
        %142 = sbr.rel (%p139) target = $region12
      $region11: #{tpu_custom_call.1} parent=5 // pred_region
        %s143 = ssub.s32 %s16, 1
        // Predicated region
        $region13: #{tpu_custom_call.1} parent=11 // pred_check
          %p144 = pneg %p103
        $region14: #{tpu_custom_call.1} parent=11 // pred_check_branch
          %146 = sbr.rel (%p144) target = $region16
        $region15: #{tpu_custom_call.1} parent=11 // pred_region
          %s148 = ssub.s32 32, 32
          %149 = vsyncadd [#allocation7], %s148
          %s151 = sshll.u32 [#allocation8], 4
          %s152 = int_to_ptr.vmem [resolvable:$true] %s151
          %154 = dma.hbm_to_vmem [thread:$0]  %s2, 32, %s152, [#allocation7]
        $region16: #{tpu_custom_call.1} parent=11 // pred_fallthru
          _
      $region12: #{tpu_custom_call.1} parent=5 // pred_fallthru
        _
      %p155 = scmp.lt.s32.totalorder %s16, 3
      // Predicated region
      $region17: #{tpu_custom_call.1} parent=5 // pred_check
        %p156 = pneg %p155
      $region18: #{tpu_custom_call.1} parent=5 // pred_check_branch
        %158 = sbr.rel (%p156) target = $region20
      $region19: #{tpu_custom_call.1} parent=5 // pred_region
        // Predicated region
        $region21: #{tpu_custom_call.1} parent=19 // pred_check
          %p159 = pneg %p50
        $region22: #{tpu_custom_call.1} parent=19 // pred_check_branch
          %161 = sbr.rel (%p159) target = $region24
        $region23: #{tpu_custom_call.1} parent=19 // pred_region
          %s162 = sand.u32 %s40, 1
          %s163 = scalar_lea.sflag [#allocation4], %s162
          %s164 = sand.u32 %s40, 1
          %s165 = smul.addr %s164, 640
          %s166 = scalar_lea.vmem [#allocation3], %s165
          %s167 = smul.u32 16, %s23
          %s168 = smul.u32 10, %s24
          %s170 = ssub.s32 10240, 10240
          %171 = vsyncadd %s163, %s170
          %s172 = smul.addr %s167, 30
          %s173 = sadd.s32 %s168, %s172
          %s174 = smul.addr %s173, 64
          %s175 = scalar_lea.hbm %s0, %s174
          %s176 = sshll.u32 %s166, 4
          %s177 = int_to_ptr.vmem [resolvable:$true] %s176
          %182 = dma.hbm_to_vmem [thread:$0]  %s175, 10240, %s177, %s163, 1920, 640, 40
        $region24: #{tpu_custom_call.1} parent=19 // pred_fallthru
          _
        // Predicated region
        $region25: #{tpu_custom_call.1} parent=19 // pred_check
          %p183 = pneg %p76
        $region26: #{tpu_custom_call.1} parent=19 // pred_check_branch
          %185 = sbr.rel (%p183) target = $region28
        $region27: #{tpu_custom_call.1} parent=19 // pred_region
          %s186 = sand.u32 %s16, 1
          %s187 = scalar_lea.sflag [#allocation7], %s186
          %s188 = sand.u32 %s66, 1
          %s189 = smul.addr %s188, 1280
          %s190 = scalar_lea.vmem [#allocation6], %s189
          %s191 = smul.u32 160, %s24
          %s193 = ssub.s32 20480, 20480
          %194 = vsyncadd %s187, %s193
          %s195 = smul.addr %s191, 2
          %s196 = smul.addr %s195, 64
          %s197 = scalar_lea.hbm %s1, %s196
          %s198 = sshll.u32 %s190, 4
          %s199 = int_to_ptr.vmem [resolvable:$true] %s198
          %204 = dma.hbm_to_vmem [thread:$0]  %s197, 20480, %s199, %s187, 128, 128, 8
        $region28: #{tpu_custom_call.1} parent=19 // pred_fallthru
          _
      $region20: #{tpu_custom_call.1} parent=5 // pred_fallthru
        _
      %p205 = scmp.le.s32.totalorder 1, %s16
      %p206 = scmp.lt.s32.totalorder %s16, 4
      %p207 = pnand %p205, %p206
      %p208 = pneg %p207
      // Predicated region
      $region29: #{tpu_custom_call.1} parent=5 // pred_check
        _
      $region30: #{tpu_custom_call.1} parent=5 // pred_check_branch
        %210 = sbr.rel (%p207) target = $region32
      $region31: #{tpu_custom_call.1} parent=5 // pred_region
        %s211 = ssub.s32 %s16, 1
        %s212 = sand.u32 %s43, 1
        %s213 = scalar_lea.sflag [#allocation4], %s212
        %s214 = sand.u32 %s43, 1
        %s215 = smul.addr %s214, 640
        %s216 = scalar_lea.vmem [#allocation3], %s215
        // Predicated region
        $region33: #{tpu_custom_call.1} parent=31 // pred_check
          %p217 = pneg %p56
        $region34: #{tpu_custom_call.1} parent=31 // pred_check_branch
          %219 = sbr.rel (%p217) target = $region36
        $region35: #{tpu_custom_call.1} parent=31 // pred_region
          %220 = dma.done %s213, 10240
        $region36: #{tpu_custom_call.1} parent=31 // pred_fallthru
          _
        %s221 = sand.u32 %s21, 1
        %s222 = scalar_lea.sflag [#allocation7], %s221
        %s223 = sand.u32 %s69, 1
        %s224 = smul.addr %s223, 1280
        %s225 = scalar_lea.vmem [#allocation6], %s224
        // Predicated region
        $region37: #{tpu_custom_call.1} parent=31 // pred_check
          %p226 = pneg %p82
        $region38: #{tpu_custom_call.1} parent=31 // pred_check_branch
          %228 = sbr.rel (%p226) target = $region40
        $region39: #{tpu_custom_call.1} parent=31 // pred_region
          %229 = dma.done %s222, 20480
        $region40: #{tpu_custom_call.1} parent=31 // pred_fallthru
          _
        // Predicated region
        $region41: #{tpu_custom_call.1} parent=31 // pred_check
          %p230 = pneg %p103
        $region42: #{tpu_custom_call.1} parent=31 // pred_check_branch
          %232 = sbr.rel (%p230) target = $region44
        $region43: #{tpu_custom_call.1} parent=31 // pred_region
          %233 = dma.done [#allocation7], 32
        $region44: #{tpu_custom_call.1} parent=31 // pred_fallthru
          _
        %s234 = sand.u32 %s43, 1
        %s235 = scalar_lea.sflag [#allocation4], %s234
        %s236 = sand.u32 %s43, 1
        %s237 = smul.addr %s236, 640
        %s238 = scalar_lea.vmem [#allocation3], %s237
        %p239 = pneg %p56
        %p240 = pneg %p53
        %s241 = sand.u32 %s21, 1
        %s242 = scalar_lea.sflag [#allocation7], %s241
        %s243 = sand.u32 %s69, 1
        %s244 = smul.addr %s243, 1280
        %s245 = scalar_lea.vmem [#allocation6], %s244
        %p246 = pneg %p82
        %p247 = pneg %p79
        %p248 = pneg %p103
        %p249 = pneg %p100
        %p250 = pneg %p129
        %p251 = pneg %p126
        %s252 = smul.u32 16, %s25
        %s253 = smul.u32 10, %s26
        %s254 = smul.u32 160, %s26
        %s255 = smul.u32 16, %s25
        %p256 = scmp.eq.s32.totalorder %s26, 0
        // Predicated region
        $region45: #{tpu_custom_call.1} parent=31 // pred_check
          %p257 = pneg %p256
        $region46: #{tpu_custom_call.1} parent=31 // pred_check_branch
          %259 = sbr.rel (%p257) target = $region48
        $region47: #{tpu_custom_call.1} parent=31 // pred_region
          %260 = vst [vmem:[#allocation2] sm:$0xff] 0.0
          %261 = vst [vmem:[#allocation2 + $0x8] sm:$0xff] 0.0
          %262 = vst [vmem:[#allocation2 + $0x10] sm:$0xff] 0.0
          %263 = vst [vmem:[#allocation2 + $0x18] sm:$0xff] 0.0
          %264 = vst [vmem:[#allocation2 + $0x20] sm:$0xff] 0.0
          %265 = vst [vmem:[#allocation2 + $0x28] sm:$0xff] 0.0
          %266 = vst [vmem:[#allocation2 + $0x30] sm:$0xff] 0.0
          %267 = vst [vmem:[#allocation2 + $0x38] sm:$0xff] 0.0
          %268 = vst [vmem:[#allocation2 + $0x40] sm:$0xff] 0.0
          %269 = vst [vmem:[#allocation2 + $0x48] sm:$0xff] 0.0
          %270 = vst [vmem:[#allocation2 + $0x50] sm:$0xff] 0.0
          %271 = vst [vmem:[#allocation2 + $0x58] sm:$0xff] 0.0
          %272 = vst [vmem:[#allocation2 + $0x60] sm:$0xff] 0.0
          %273 = vst [vmem:[#allocation2 + $0x68] sm:$0xff] 0.0
          %274 = vst [vmem:[#allocation2 + $0x70] sm:$0xff] 0.0
          %275 = vst [vmem:[#allocation2 + $0x78] sm:$0xff] 0.0
          %276 = vst [vmem:[#allocation2 + $0x80] sm:$0xff] 0.0
          %277 = vst [vmem:[#allocation2 + $0x88] sm:$0xff] 0.0
          %278 = vst [vmem:[#allocation2 + $0x90] sm:$0xff] 0.0
          %279 = vst [vmem:[#allocation2 + $0x98] sm:$0xff] 0.0
          %280 = vst [vmem:[#allocation2 + $0xa0] sm:$0xff] 0.0
          %281 = vst [vmem:[#allocation2 + $0xa8] sm:$0xff] 0.0
          %282 = vst [vmem:[#allocation2 + $0xb0] sm:$0xff] 0.0
          %283 = vst [vmem:[#allocation2 + $0xb8] sm:$0xff] 0.0
          %284 = vst [vmem:[#allocation2 + $0xc0] sm:$0xff] 0.0
          %285 = vst [vmem:[#allocation2 + $0xc8] sm:$0xff] 0.0
          %286 = vst [vmem:[#allocation2 + $0xd0] sm:$0xff] 0.0
          %287 = vst [vmem:[#allocation2 + $0xd8] sm:$0xff] 0.0
          %288 = vst [vmem:[#allocation2 + $0xe0] sm:$0xff] 0.0
          %289 = vst [vmem:[#allocation2 + $0xe8] sm:$0xff] 0.0
          %290 = vst [vmem:[#allocation2 + $0xf0] sm:$0xff] 0.0
          %291 = vst [vmem:[#allocation2 + $0xf8] sm:$0xff] 0.0
        $region48: #{tpu_custom_call.1} parent=31 // pred_fallthru
          _
        %v292 = vld [vmem:[#allocation2] sm:$0xff]
        %v293 = vld [vmem:[#allocation2 + $0x8] sm:$0xff]
        %v294 = vld [vmem:[#allocation2 + $0x10] sm:$0xff]
        %v295 = vld [vmem:[#allocation2 + $0x18] sm:$0xff]
        %v296 = vld [vmem:[#allocation2 + $0x20] sm:$0xff]
        %v297 = vld [vmem:[#allocation2 + $0x28] sm:$0xff]
        %v298 = vld [vmem:[#allocation2 + $0x30] sm:$0xff]
        %v299 = vld [vmem:[#allocation2 + $0x38] sm:$0xff]
        %v300 = vld [vmem:[#allocation2 + $0x40] sm:$0xff]
        %v301 = vld [vmem:[#allocation2 + $0x48] sm:$0xff]
        %v302 = vld [vmem:[#allocation2 + $0x50] sm:$0xff]
        %v303 = vld [vmem:[#allocation2 + $0x58] sm:$0xff]
        %v304 = vld [vmem:[#allocation2 + $0x60] sm:$0xff]
        %v305 = vld [vmem:[#allocation2 + $0x68] sm:$0xff]
        %v306 = vld [vmem:[#allocation2 + $0x70] sm:$0xff]
        %v307 = vld [vmem:[#allocation2 + $0x78] sm:$0xff]
        %v308 = vld [vmem:[#allocation2 + $0x80] sm:$0xff]
        %v309 = vld [vmem:[#allocation2 + $0x88] sm:$0xff]
        %v310 = vld [vmem:[#allocation2 + $0x90] sm:$0xff]
        %v311 = vld [vmem:[#allocation2 + $0x98] sm:$0xff]
        %v312 = vld [vmem:[#allocation2 + $0xa0] sm:$0xff]
        %v313 = vld [vmem:[#allocation2 + $0xa8] sm:$0xff]
        %v314 = vld [vmem:[#allocation2 + $0xb0] sm:$0xff]
        %v315 = vld [vmem:[#allocation2 + $0xb8] sm:$0xff]
        %v316 = vld [vmem:[#allocation2 + $0xc0] sm:$0xff]
        %v317 = vld [vmem:[#allocation2 + $0xc8] sm:$0xff]
        %v318 = vld [vmem:[#allocation2 + $0xd0] sm:$0xff]
        %v319 = vld [vmem:[#allocation2 + $0xd8] sm:$0xff]
        %v320 = vld [vmem:[#allocation2 + $0xe0] sm:$0xff]
        %v321 = vld [vmem:[#allocation2 + $0xe8] sm:$0xff]
        %v322 = vld [vmem:[#allocation2 + $0xf0] sm:$0xff]
        %v323 = vld [vmem:[#allocation2 + $0xf8] sm:$0xff]
        %v324 = vld [vmem:[%s216] sm:$0xff]
        %v325 = vld [vmem:[%s216 + $0x8] sm:$0xff]
        %v326 = vld [vmem:[%s216 + $0x10] sm:$0xff]
        %v327 = vld [vmem:[%s216 + $0x18] sm:$0xff]
        %v328 = vld [vmem:[%s216 + $0x20] sm:$0xff]
        %v329 = vld [vmem:[%s216 + $0x28] sm:$0xff]
        %v330 = vld [vmem:[%s216 + $0x30] sm:$0xff]
        %v331 = vld [vmem:[%s216 + $0x38] sm:$0xff]
        %v332 = vld [vmem:[%s216 + $0x40] sm:$0xff]
        %v333 = vld [vmem:[%s216 + $0x48] sm:$0xff]
        %v334 = vld [vmem:[%s216 + $0x50] sm:$0xff]
        %v335 = vld [vmem:[%s216 + $0x58] sm:$0xff]
        %v336 = vld [vmem:[%s216 + $0x60] sm:$0xff]
        %v337 = vld [vmem:[%s216 + $0x68] sm:$0xff]
        %v338 = vld [vmem:[%s216 + $0x70] sm:$0xff]
        %v339 = vld [vmem:[%s216 + $0x78] sm:$0xff]
        %v340 = vld [vmem:[%s216 + $0x80] sm:$0xff]
        %v341 = vld [vmem:[%s216 + $0x88] sm:$0xff]
        %v342 = vld [vmem:[%s216 + $0x90] sm:$0xff]
        %v343 = vld [vmem:[%s216 + $0x98] sm:$0xff]
        %v344 = vld [vmem:[%s216 + $0xa0] sm:$0xff]
        %v345 = vld [vmem:[%s216 + $0xa8] sm:$0xff]
        %v346 = vld [vmem:[%s216 + $0xb0] sm:$0xff]
        %v347 = vld [vmem:[%s216 + $0xb8] sm:$0xff]
        %v348 = vld [vmem:[%s216 + $0xc0] sm:$0xff]
        %v349 = vld [vmem:[%s216 + $0xc8] sm:$0xff]
        %v350 = vld [vmem:[%s216 + $0xd0] sm:$0xff]
        %v351 = vld [vmem:[%s216 + $0xd8] sm:$0xff]
        %v352 = vld [vmem:[%s216 + $0xe0] sm:$0xff]
        %v353 = vld [vmem:[%s216 + $0xe8] sm:$0xff]
        %v354 = vld [vmem:[%s216 + $0xf0] sm:$0xff]
        %v355 = vld [vmem:[%s216 + $0xf8] sm:$0xff]
        %v356 = vld [vmem:[%s216 + $0x100] sm:$0xff]
        %v357 = vld [vmem:[%s216 + $0x108] sm:$0xff]
        %v358 = vld [vmem:[%s216 + $0x110] sm:$0xff]
        %v359 = vld [vmem:[%s216 + $0x118] sm:$0xff]
        %v360 = vld [vmem:[%s216 + $0x120] sm:$0xff]
        %v361 = vld [vmem:[%s216 + $0x128] sm:$0xff]
        %v362 = vld [vmem:[%s216 + $0x130] sm:$0xff]
        %v363 = vld [vmem:[%s216 + $0x138] sm:$0xff]
        %v364 = vld [vmem:[%s216 + $0x140] sm:$0xff]
        %v365 = vld [vmem:[%s216 + $0x148] sm:$0xff]
        %v366 = vld [vmem:[%s216 + $0x150] sm:$0xff]
        %v367 = vld [vmem:[%s216 + $0x158] sm:$0xff]
        %v368 = vld [vmem:[%s216 + $0x160] sm:$0xff]
        %v369 = vld [vmem:[%s216 + $0x168] sm:$0xff]
        %v370 = vld [vmem:[%s216 + $0x170] sm:$0xff]
        %v371 = vld [vmem:[%s216 + $0x178] sm:$0xff]
        %v372 = vld [vmem:[%s216 + $0x180] sm:$0xff]
        %v373 = vld [vmem:[%s216 + $0x188] sm:$0xff]
        %v374 = vld [vmem:[%s216 + $0x190] sm:$0xff]
        %v375 = vld [vmem:[%s216 + $0x198] sm:$0xff]
        %v376 = vld [vmem:[%s216 + $0x1a0] sm:$0xff]
        %v377 = vld [vmem:[%s216 + $0x1a8] sm:$0xff]
        %v378 = vld [vmem:[%s216 + $0x1b0] sm:$0xff]
        %v379 = vld [vmem:[%s216 + $0x1b8] sm:$0xff]
        %v380 = vld [vmem:[%s216 + $0x1c0] sm:$0xff]
        %v381 = vld [vmem:[%s216 + $0x1c8] sm:$0xff]
        %v382 = vld [vmem:[%s216 + $0x1d0] sm:$0xff]
        %v383 = vld [vmem:[%s216 + $0x1d8] sm:$0xff]
        %v384 = vld [vmem:[%s216 + $0x1e0] sm:$0xff]
        %v385 = vld [vmem:[%s216 + $0x1e8] sm:$0xff]
        %v386 = vld [vmem:[%s216 + $0x1f0] sm:$0xff]
        %v387 = vld [vmem:[%s216 + $0x1f8] sm:$0xff]
        %v388 = vld [vmem:[%s216 + $0x200] sm:$0xff]
        %v389 = vld [vmem:[%s216 + $0x208] sm:$0xff]
        %v390 = vld [vmem:[%s216 + $0x210] sm:$0xff]
        %v391 = vld [vmem:[%s216 + $0x218] sm:$0xff]
        %v392 = vld [vmem:[%s216 + $0x220] sm:$0xff]
        %v393 = vld [vmem:[%s216 + $0x228] sm:$0xff]
        %v394 = vld [vmem:[%s216 + $0x230] sm:$0xff]
        %v395 = vld [vmem:[%s216 + $0x238] sm:$0xff]
        %v396 = vld [vmem:[%s216 + $0x240] sm:$0xff]
        %v397 = vld [vmem:[%s216 + $0x248] sm:$0xff]
        %v398 = vld [vmem:[%s216 + $0x250] sm:$0xff]
        %v399 = vld [vmem:[%s216 + $0x258] sm:$0xff]
        %v400 = vld [vmem:[%s216 + $0x260] sm:$0xff]
        %v401 = vld [vmem:[%s216 + $0x268] sm:$0xff]
        %v402 = vld [vmem:[%s216 + $0x270] sm:$0xff]
        %v403 = vld [vmem:[%s216 + $0x278] sm:$0xff]
        %v404 = vld [vmem:[%s225] sm:$0xff]
        %v405 = vld [vmem:[%s225 + $0x8] sm:$0xff]
        %v406 = vld [vmem:[%s225 + $0x10] sm:$0xff]
        %v407 = vld [vmem:[%s225 + $0x18] sm:$0xff]
        %v408 = vld [vmem:[%s225 + $0x20] sm:$0xff]
        %v409 = vld [vmem:[%s225 + $0x28] sm:$0xff]
        %v410 = vld [vmem:[%s225 + $0x30] sm:$0xff]
        %v411 = vld [vmem:[%s225 + $0x38] sm:$0xff]
        %v412 = vld [vmem:[%s225 + $0x40] sm:$0xff]
        %v413 = vld [vmem:[%s225 + $0x48] sm:$0xff]
        %v414 = vld [vmem:[%s225 + $0x50] sm:$0xff]
        %v415 = vld [vmem:[%s225 + $0x58] sm:$0xff]
        %v416 = vld [vmem:[%s225 + $0x60] sm:$0xff]
        %v417 = vld [vmem:[%s225 + $0x68] sm:$0xff]
        %v418 = vld [vmem:[%s225 + $0x70] sm:$0xff]
        %v419 = vld [vmem:[%s225 + $0x78] sm:$0xff]
        %v420 = vld [vmem:[%s225 + $0x80] sm:$0xff]
        %v421 = vld [vmem:[%s225 + $0x88] sm:$0xff]
        %v422 = vld [vmem:[%s225 + $0x90] sm:$0xff]
        %v423 = vld [vmem:[%s225 + $0x98] sm:$0xff]
        %v424 = vld [vmem:[%s225 + $0xa0] sm:$0xff]
        %v425 = vld [vmem:[%s225 + $0xa8] sm:$0xff]
        %v426 = vld [vmem:[%s225 + $0xb0] sm:$0xff]
        %v427 = vld [vmem:[%s225 + $0xb8] sm:$0xff]
        %v428 = vld [vmem:[%s225 + $0xc0] sm:$0xff]
        %v429 = vld [vmem:[%s225 + $0xc8] sm:$0xff]
        %v430 = vld [vmem:[%s225 + $0xd0] sm:$0xff]
        %v431 = vld [vmem:[%s225 + $0xd8] sm:$0xff]
        %v432 = vld [vmem:[%s225 + $0xe0] sm:$0xff]
        %v433 = vld [vmem:[%s225 + $0xe8] sm:$0xff]
        %v434 = vld [vmem:[%s225 + $0xf0] sm:$0xff]
        %v435 = vld [vmem:[%s225 + $0xf8] sm:$0xff]
        %v436 = vld [vmem:[%s225 + $0x100] sm:$0xff]
        %v437 = vld [vmem:[%s225 + $0x108] sm:$0xff]
        %v438 = vld [vmem:[%s225 + $0x110] sm:$0xff]
        %v439 = vld [vmem:[%s225 + $0x118] sm:$0xff]
        %v440 = vld [vmem:[%s225 + $0x120] sm:$0xff]
        %v441 = vld [vmem:[%s225 + $0x128] sm:$0xff]
        %v442 = vld [vmem:[%s225 + $0x130] sm:$0xff]
        %v443 = vld [vmem:[%s225 + $0x138] sm:$0xff]
        %v444 = vld [vmem:[%s225 + $0x140] sm:$0xff]
        %v445 = vld [vmem:[%s225 + $0x148] sm:$0xff]
        %v446 = vld [vmem:[%s225 + $0x150] sm:$0xff]
        %v447 = vld [vmem:[%s225 + $0x158] sm:$0xff]
        %v448 = vld [vmem:[%s225 + $0x160] sm:$0xff]
        %v449 = vld [vmem:[%s225 + $0x168] sm:$0xff]
        %v450 = vld [vmem:[%s225 + $0x170] sm:$0xff]
        %v451 = vld [vmem:[%s225 + $0x178] sm:$0xff]
        %v452 = vld [vmem:[%s225 + $0x180] sm:$0xff]
        %v453 = vld [vmem:[%s225 + $0x188] sm:$0xff]
        %v454 = vld [vmem:[%s225 + $0x190] sm:$0xff]
        %v455 = vld [vmem:[%s225 + $0x198] sm:$0xff]
        %v456 = vld [vmem:[%s225 + $0x1a0] sm:$0xff]
        %v457 = vld [vmem:[%s225 + $0x1a8] sm:$0xff]
        %v458 = vld [vmem:[%s225 + $0x1b0] sm:$0xff]
        %v459 = vld [vmem:[%s225 + $0x1b8] sm:$0xff]
        %v460 = vld [vmem:[%s225 + $0x1c0] sm:$0xff]
        %v461 = vld [vmem:[%s225 + $0x1c8] sm:$0xff]
        %v462 = vld [vmem:[%s225 + $0x1d0] sm:$0xff]
        %v463 = vld [vmem:[%s225 + $0x1d8] sm:$0xff]
        %v464 = vld [vmem:[%s225 + $0x1e0] sm:$0xff]
        %v465 = vld [vmem:[%s225 + $0x1e8] sm:$0xff]
        %v466 = vld [vmem:[%s225 + $0x1f0] sm:$0xff]
        %v467 = vld [vmem:[%s225 + $0x1f8] sm:$0xff]
        %v468 = vld [vmem:[%s225 + $0x200] sm:$0xff]
        %v469 = vld [vmem:[%s225 + $0x208] sm:$0xff]
        %v470 = vld [vmem:[%s225 + $0x210] sm:$0xff]
        %v471 = vld [vmem:[%s225 + $0x218] sm:$0xff]
        %v472 = vld [vmem:[%s225 + $0x220] sm:$0xff]
        %v473 = vld [vmem:[%s225 + $0x228] sm:$0xff]
        %v474 = vld [vmem:[%s225 + $0x230] sm:$0xff]
        %v475 = vld [vmem:[%s225 + $0x238] sm:$0xff]
        %v476 = vld [vmem:[%s225 + $0x240] sm:$0xff]
        %v477 = vld [vmem:[%s225 + $0x248] sm:$0xff]
        %v478 = vld [vmem:[%s225 + $0x250] sm:$0xff]
        %v479 = vld [vmem:[%s225 + $0x258] sm:$0xff]
        %v480 = vld [vmem:[%s225 + $0x260] sm:$0xff]
        %v481 = vld [vmem:[%s225 + $0x268] sm:$0xff]
        %v482 = vld [vmem:[%s225 + $0x270] sm:$0xff]
        %v483 = vld [vmem:[%s225 + $0x278] sm:$0xff]
        %v484 = vld [vmem:[%s225 + $0x280] sm:$0xff]
        %v485 = vld [vmem:[%s225 + $0x288] sm:$0xff]
        %v486 = vld [vmem:[%s225 + $0x290] sm:$0xff]
        %v487 = vld [vmem:[%s225 + $0x298] sm:$0xff]
        %v488 = vld [vmem:[%s225 + $0x2a0] sm:$0xff]
        %v489 = vld [vmem:[%s225 + $0x2a8] sm:$0xff]
        %v490 = vld [vmem:[%s225 + $0x2b0] sm:$0xff]
        %v491 = vld [vmem:[%s225 + $0x2b8] sm:$0xff]
        %v492 = vld [vmem:[%s225 + $0x2c0] sm:$0xff]
        %v493 = vld [vmem:[%s225 + $0x2c8] sm:$0xff]
        %v494 = vld [vmem:[%s225 + $0x2d0] sm:$0xff]
        %v495 = vld [vmem:[%s225 + $0x2d8] sm:$0xff]
        %v496 = vld [vmem:[%s225 + $0x2e0] sm:$0xff]
        %v497 = vld [vmem:[%s225 + $0x2e8] sm:$0xff]
        %v498 = vld [vmem:[%s225 + $0x2f0] sm:$0xff]
        %v499 = vld [vmem:[%s225 + $0x2f8] sm:$0xff]
        %v500 = vld [vmem:[%s225 + $0x300] sm:$0xff]
        %v501 = vld [vmem:[%s225 + $0x308] sm:$0xff]
        %v502 = vld [vmem:[%s225 + $0x310] sm:$0xff]
        %v503 = vld [vmem:[%s225 + $0x318] sm:$0xff]
        %v504 = vld [vmem:[%s225 + $0x320] sm:$0xff]
        %v505 = vld [vmem:[%s225 + $0x328] sm:$0xff]
        %v506 = vld [vmem:[%s225 + $0x330] sm:$0xff]
        %v507 = vld [vmem:[%s225 + $0x338] sm:$0xff]
        %v508 = vld [vmem:[%s225 + $0x340] sm:$0xff]
        %v509 = vld [vmem:[%s225 + $0x348] sm:$0xff]
        %v510 = vld [vmem:[%s225 + $0x350] sm:$0xff]
        %v511 = vld [vmem:[%s225 + $0x358] sm:$0xff]
        %v512 = vld [vmem:[%s225 + $0x360] sm:$0xff]
        %v513 = vld [vmem:[%s225 + $0x368] sm:$0xff]
        %v514 = vld [vmem:[%s225 + $0x370] sm:$0xff]
        %v515 = vld [vmem:[%s225 + $0x378] sm:$0xff]
        %v516 = vld [vmem:[%s225 + $0x380] sm:$0xff]
        %v517 = vld [vmem:[%s225 + $0x388] sm:$0xff]
        %v518 = vld [vmem:[%s225 + $0x390] sm:$0xff]
        %v519 = vld [vmem:[%s225 + $0x398] sm:$0xff]
        %v520 = vld [vmem:[%s225 + $0x3a0] sm:$0xff]
        %v521 = vld [vmem:[%s225 + $0x3a8] sm:$0xff]
        %v522 = vld [vmem:[%s225 + $0x3b0] sm:$0xff]
        %v523 = vld [vmem:[%s225 + $0x3b8] sm:$0xff]
        %v524 = vld [vmem:[%s225 + $0x3c0] sm:$0xff]
        %v525 = vld [vmem:[%s225 + $0x3c8] sm:$0xff]
        %v526 = vld [vmem:[%s225 + $0x3d0] sm:$0xff]
        %v527 = vld [vmem:[%s225 + $0x3d8] sm:$0xff]
        %v528 = vld [vmem:[%s225 + $0x3e0] sm:$0xff]
        %v529 = vld [vmem:[%s225 + $0x3e8] sm:$0xff]
        %v530 = vld [vmem:[%s225 + $0x3f0] sm:$0xff]
        %v531 = vld [vmem:[%s225 + $0x3f8] sm:$0xff]
        %v532 = vld [vmem:[%s225 + $0x400] sm:$0xff]
        %v533 = vld [vmem:[%s225 + $0x408] sm:$0xff]
        %v534 = vld [vmem:[%s225 + $0x410] sm:$0xff]
        %v535 = vld [vmem:[%s225 + $0x418] sm:$0xff]
        %v536 = vld [vmem:[%s225 + $0x420] sm:$0xff]
        %v537 = vld [vmem:[%s225 + $0x428] sm:$0xff]
        %v538 = vld [vmem:[%s225 + $0x430] sm:$0xff]
        %v539 = vld [vmem:[%s225 + $0x438] sm:$0xff]
        %v540 = vld [vmem:[%s225 + $0x440] sm:$0xff]
        %v541 = vld [vmem:[%s225 + $0x448] sm:$0xff]
        %v542 = vld [vmem:[%s225 + $0x450] sm:$0xff]
        %v543 = vld [vmem:[%s225 + $0x458] sm:$0xff]
        %v544 = vld [vmem:[%s225 + $0x460] sm:$0xff]
        %v545 = vld [vmem:[%s225 + $0x468] sm:$0xff]
        %v546 = vld [vmem:[%s225 + $0x470] sm:$0xff]
        %v547 = vld [vmem:[%s225 + $0x478] sm:$0xff]
        %v548 = vld [vmem:[%s225 + $0x480] sm:$0xff]
        %v549 = vld [vmem:[%s225 + $0x488] sm:$0xff]
        %v550 = vld [vmem:[%s225 + $0x490] sm:$0xff]
        %v551 = vld [vmem:[%s225 + $0x498] sm:$0xff]
        %v552 = vld [vmem:[%s225 + $0x4a0] sm:$0xff]
        %v553 = vld [vmem:[%s225 + $0x4a8] sm:$0xff]
        %v554 = vld [vmem:[%s225 + $0x4b0] sm:$0xff]
        %v555 = vld [vmem:[%s225 + $0x4b8] sm:$0xff]
        %v556 = vld [vmem:[%s225 + $0x4c0] sm:$0xff]
        %v557 = vld [vmem:[%s225 + $0x4c8] sm:$0xff]
        %v558 = vld [vmem:[%s225 + $0x4d0] sm:$0xff]
        %v559 = vld [vmem:[%s225 + $0x4d8] sm:$0xff]
        %v560 = vld [vmem:[%s225 + $0x4e0] sm:$0xff]
        %v561 = vld [vmem:[%s225 + $0x4e8] sm:$0xff]
        %v562 = vld [vmem:[%s225 + $0x4f0] sm:$0xff]
        %v563 = vld [vmem:[%s225 + $0x4f8] sm:$0xff]
        %v644 = vunpack.c.l.b16 %v324
        %v645 = vunpack.c.h.b16 %v324
        %v646 = vunpack.c.l.b16 %v325
        %v647 = vunpack.c.h.b16 %v325
        %v648 = vunpack.c.l.b16 %v326
        %v649 = vunpack.c.h.b16 %v326
        %v650 = vunpack.c.l.b16 %v327
        %v651 = vunpack.c.h.b16 %v327
        %v652 = vunpack.c.l.b16 %v328
        %v653 = vunpack.c.h.b16 %v328
        %v654 = vunpack.c.l.b16 %v329
        %v655 = vunpack.c.h.b16 %v329
        %v656 = vunpack.c.l.b16 %v330
        %v657 = vunpack.c.h.b16 %v330
        %v658 = vunpack.c.l.b16 %v331
        %v659 = vunpack.c.h.b16 %v331
        %v660 = vunpack.c.l.b16 %v332
        %v661 = vunpack.c.h.b16 %v332
        %v662 = vunpack.c.l.b16 %v333
        %v663 = vunpack.c.h.b16 %v333
        %v664 = vunpack.c.l.b16 %v334
        %v665 = vunpack.c.h.b16 %v334
        %v666 = vunpack.c.l.b16 %v335
        %v667 = vunpack.c.h.b16 %v335
        %v668 = vunpack.c.l.b16 %v336
        %v669 = vunpack.c.h.b16 %v336
        %v670 = vunpack.c.l.b16 %v337
        %v671 = vunpack.c.h.b16 %v337
        %v672 = vunpack.c.l.b16 %v338
        %v673 = vunpack.c.h.b16 %v338
        %v674 = vunpack.c.l.b16 %v339
        %v675 = vunpack.c.h.b16 %v339
        %v676 = vunpack.c.l.b16 %v340
        %v677 = vunpack.c.h.b16 %v340
        %v678 = vunpack.c.l.b16 %v341
        %v679 = vunpack.c.h.b16 %v341
        %v680 = vunpack.c.l.b16 %v342
        %v681 = vunpack.c.h.b16 %v342
        %v682 = vunpack.c.l.b16 %v343
        %v683 = vunpack.c.h.b16 %v343
        %v684 = vunpack.c.l.b16 %v344
        %v685 = vunpack.c.h.b16 %v344
        %v686 = vunpack.c.l.b16 %v345
        %v687 = vunpack.c.h.b16 %v345
        %v688 = vunpack.c.l.b16 %v346
        %v689 = vunpack.c.h.b16 %v346
        %v690 = vunpack.c.l.b16 %v347
        %v691 = vunpack.c.h.b16 %v347
        %v692 = vunpack.c.l.b16 %v348
        %v693 = vunpack.c.h.b16 %v348
        %v694 = vunpack.c.l.b16 %v349
        %v695 = vunpack.c.h.b16 %v349
        %v696 = vunpack.c.l.b16 %v350
        %v697 = vunpack.c.h.b16 %v350
        %v698 = vunpack.c.l.b16 %v351
        %v699 = vunpack.c.h.b16 %v351
        %v700 = vunpack.c.l.b16 %v352
        %v701 = vunpack.c.h.b16 %v352
        %v702 = vunpack.c.l.b16 %v353
        %v703 = vunpack.c.h.b16 %v353
        %v704 = vunpack.c.l.b16 %v354
        %v705 = vunpack.c.h.b16 %v354
        %v706 = vunpack.c.l.b16 %v355
        %v707 = vunpack.c.h.b16 %v355
        %v708 = vunpack.c.l.b16 %v356
        %v709 = vunpack.c.h.b16 %v356
        %v710 = vunpack.c.l.b16 %v357
        %v711 = vunpack.c.h.b16 %v357
        %v712 = vunpack.c.l.b16 %v358
        %v713 = vunpack.c.h.b16 %v358
        %v714 = vunpack.c.l.b16 %v359
        %v715 = vunpack.c.h.b16 %v359
        %v716 = vunpack.c.l.b16 %v360
        %v717 = vunpack.c.h.b16 %v360
        %v718 = vunpack.c.l.b16 %v361
        %v719 = vunpack.c.h.b16 %v361
        %v720 = vunpack.c.l.b16 %v362
        %v721 = vunpack.c.h.b16 %v362
        %v722 = vunpack.c.l.b16 %v363
        %v723 = vunpack.c.h.b16 %v363
        %v724 = vunpack.c.l.b16 %v364
        %v725 = vunpack.c.h.b16 %v364
        %v726 = vunpack.c.l.b16 %v365
        %v727 = vunpack.c.h.b16 %v365
        %v728 = vunpack.c.l.b16 %v366
        %v729 = vunpack.c.h.b16 %v366
        %v730 = vunpack.c.l.b16 %v367
        %v731 = vunpack.c.h.b16 %v367
        %v732 = vunpack.c.l.b16 %v368
        %v733 = vunpack.c.h.b16 %v368
        %v734 = vunpack.c.l.b16 %v369
        %v735 = vunpack.c.h.b16 %v369
        %v736 = vunpack.c.l.b16 %v370
        %v737 = vunpack.c.h.b16 %v370
        %v738 = vunpack.c.l.b16 %v371
        %v739 = vunpack.c.h.b16 %v371
        %v740 = vunpack.c.l.b16 %v372
        %v741 = vunpack.c.h.b16 %v372
        %v742 = vunpack.c.l.b16 %v373
        %v743 = vunpack.c.h.b16 %v373
        %v744 = vunpack.c.l.b16 %v374
        %v745 = vunpack.c.h.b16 %v374
        %v746 = vunpack.c.l.b16 %v375
        %v747 = vunpack.c.h.b16 %v375
        %v748 = vunpack.c.l.b16 %v376
        %v749 = vunpack.c.h.b16 %v376
        %v750 = vunpack.c.l.b16 %v377
        %v751 = vunpack.c.h.b16 %v377
        %v752 = vunpack.c.l.b16 %v378
        %v753 = vunpack.c.h.b16 %v378
        %v754 = vunpack.c.l.b16 %v379
        %v755 = vunpack.c.h.b16 %v379
        %v756 = vunpack.c.l.b16 %v380
        %v757 = vunpack.c.h.b16 %v380
        %v758 = vunpack.c.l.b16 %v381
        %v759 = vunpack.c.h.b16 %v381
        %v760 = vunpack.c.l.b16 %v382
        %v761 = vunpack.c.h.b16 %v382
        %v762 = vunpack.c.l.b16 %v383
        %v763 = vunpack.c.h.b16 %v383
        %v764 = vunpack.c.l.b16 %v384
        %v765 = vunpack.c.h.b16 %v384
        %v766 = vunpack.c.l.b16 %v385
        %v767 = vunpack.c.h.b16 %v385
        %v768 = vunpack.c.l.b16 %v386
        %v769 = vunpack.c.h.b16 %v386
        %v770 = vunpack.c.l.b16 %v387
        %v771 = vunpack.c.h.b16 %v387
        %v772 = vunpack.c.l.b16 %v388
        %v773 = vunpack.c.h.b16 %v388
        %v774 = vunpack.c.l.b16 %v389
        %v775 = vunpack.c.h.b16 %v389
        %v776 = vunpack.c.l.b16 %v390
        %v777 = vunpack.c.h.b16 %v390
        %v778 = vunpack.c.l.b16 %v391
        %v779 = vunpack.c.h.b16 %v391
        %v780 = vunpack.c.l.b16 %v392
        %v781 = vunpack.c.h.b16 %v392
        %v782 = vunpack.c.l.b16 %v393
        %v783 = vunpack.c.h.b16 %v393
        %v784 = vunpack.c.l.b16 %v394
        %v785 = vunpack.c.h.b16 %v394
        %v786 = vunpack.c.l.b16 %v395
        %v787 = vunpack.c.h.b16 %v395
        %v788 = vunpack.c.l.b16 %v396
        %v789 = vunpack.c.h.b16 %v396
        %v790 = vunpack.c.l.b16 %v397
        %v791 = vunpack.c.h.b16 %v397
        %v792 = vunpack.c.l.b16 %v398
        %v793 = vunpack.c.h.b16 %v398
        %v794 = vunpack.c.l.b16 %v399
        %v795 = vunpack.c.h.b16 %v399
        %v796 = vunpack.c.l.b16 %v400
        %v797 = vunpack.c.h.b16 %v400
        %v798 = vunpack.c.l.b16 %v401
        %v799 = vunpack.c.h.b16 %v401
        %v800 = vunpack.c.l.b16 %v402
        %v801 = vunpack.c.h.b16 %v402
        %v802 = vunpack.c.l.b16 %v403
        %v803 = vunpack.c.h.b16 %v403
        %v804 = vpack.c.b16 %v654, %v644
        %v805 = vpack.c.b16 %v655, %v645
        %v806 = vpack.c.b16 %v656, %v646
        %v807 = vpack.c.b16 %v657, %v647
        %v808 = vpack.c.b16 %v658, %v648
        %v809 = vpack.c.b16 %v659, %v649
        %v810 = vpack.c.b16 %v660, %v650
        %v811 = vpack.c.b16 %v661, %v651
        %v812 = vpack.c.b16 %v662, %v652
        %v813 = vpack.c.b16 %v663, %v653
        %v814 = vpack.c.b16 %v674, %v664
        %v815 = vpack.c.b16 %v675, %v665
        %v816 = vpack.c.b16 %v676, %v666
        %v817 = vpack.c.b16 %v677, %v667
        %v818 = vpack.c.b16 %v678, %v668
        %v819 = vpack.c.b16 %v679, %v669
        %v820 = vpack.c.b16 %v680, %v670
        %v821 = vpack.c.b16 %v681, %v671
        %v822 = vpack.c.b16 %v682, %v672
        %v823 = vpack.c.b16 %v683, %v673
        %v824 = vpack.c.b16 %v694, %v684
        %v825 = vpack.c.b16 %v695, %v685
        %v826 = vpack.c.b16 %v696, %v686
        %v827 = vpack.c.b16 %v697, %v687
        %v828 = vpack.c.b16 %v698, %v688
        %v829 = vpack.c.b16 %v699, %v689
        %v830 = vpack.c.b16 %v700, %v690
        %v831 = vpack.c.b16 %v701, %v691
        %v832 = vpack.c.b16 %v702, %v692
        %v833 = vpack.c.b16 %v703, %v693
        %v834 = vpack.c.b16 %v714, %v704
        %v835 = vpack.c.b16 %v715, %v705
        %v836 = vpack.c.b16 %v716, %v706
        %v837 = vpack.c.b16 %v717, %v707
        %v838 = vpack.c.b16 %v718, %v708
        %v839 = vpack.c.b16 %v719, %v709
        %v840 = vpack.c.b16 %v720, %v710
        %v841 = vpack.c.b16 %v721, %v711
        %v842 = vpack.c.b16 %v722, %v712
        %v843 = vpack.c.b16 %v723, %v713
        %v844 = vpack.c.b16 %v734, %v724
        %v845 = vpack.c.b16 %v735, %v725
        %v846 = vpack.c.b16 %v736, %v726
        %v847 = vpack.c.b16 %v737, %v727
        %v848 = vpack.c.b16 %v738, %v728
        %v849 = vpack.c.b16 %v739, %v729
        %v850 = vpack.c.b16 %v740, %v730
        %v851 = vpack.c.b16 %v741, %v731
        %v852 = vpack.c.b16 %v742, %v732
        %v853 = vpack.c.b16 %v743, %v733
        %v854 = vpack.c.b16 %v754, %v744
        %v855 = vpack.c.b16 %v755, %v745
        %v856 = vpack.c.b16 %v756, %v746
        %v857 = vpack.c.b16 %v757, %v747
        %v858 = vpack.c.b16 %v758, %v748
        %v859 = vpack.c.b16 %v759, %v749
        %v860 = vpack.c.b16 %v760, %v750
        %v861 = vpack.c.b16 %v761, %v751
        %v862 = vpack.c.b16 %v762, %v752
        %v863 = vpack.c.b16 %v763, %v753
        %v864 = vpack.c.b16 %v774, %v764
        %v865 = vpack.c.b16 %v775, %v765
        %v866 = vpack.c.b16 %v776, %v766
        %v867 = vpack.c.b16 %v777, %v767
        %v868 = vpack.c.b16 %v778, %v768
        %v869 = vpack.c.b16 %v779, %v769
        %v870 = vpack.c.b16 %v780, %v770
        %v871 = vpack.c.b16 %v781, %v771
        %v872 = vpack.c.b16 %v782, %v772
        %v873 = vpack.c.b16 %v783, %v773
        %v874 = vpack.c.b16 %v794, %v784
        %v875 = vpack.c.b16 %v795, %v785
        %v876 = vpack.c.b16 %v796, %v786
        %v877 = vpack.c.b16 %v797, %v787
        %v878 = vpack.c.b16 %v798, %v788
        %v879 = vpack.c.b16 %v799, %v789
        %v880 = vpack.c.b16 %v800, %v790
        %v881 = vpack.c.b16 %v801, %v791
        %v882 = vpack.c.b16 %v802, %v792
        %v883 = vpack.c.b16 %v803, %v793
        %v1124 = vunpack.c.l.b16 %v404
        %v1125 = vunpack.c.h.b16 %v404
        %v1126 = vunpack.c.l.b16 %v405
        %v1127 = vunpack.c.h.b16 %v405
        %v1128 = vunpack.c.l.b16 %v406
        %v1129 = vunpack.c.h.b16 %v406
        %v1130 = vunpack.c.l.b16 %v407
        %v1131 = vunpack.c.h.b16 %v407
        %v1132 = vunpack.c.l.b16 %v408
        %v1133 = vunpack.c.h.b16 %v408
        %v1134 = vunpack.c.l.b16 %v409
        %v1135 = vunpack.c.h.b16 %v409
        %v1136 = vunpack.c.l.b16 %v410
        %v1137 = vunpack.c.h.b16 %v410
        %v1138 = vunpack.c.l.b16 %v411
        %v1139 = vunpack.c.h.b16 %v411
        %v1140 = vunpack.c.l.b16 %v412
        %v1141 = vunpack.c.h.b16 %v412
        %v1142 = vunpack.c.l.b16 %v413
        %v1143 = vunpack.c.h.b16 %v413
        %v1144 = vunpack.c.l.b16 %v414
        %v1145 = vunpack.c.h.b16 %v414
        %v1146 = vunpack.c.l.b16 %v415
        %v1147 = vunpack.c.h.b16 %v415
        %v1148 = vunpack.c.l.b16 %v416
        %v1149 = vunpack.c.h.b16 %v416
        %v1150 = vunpack.c.l.b16 %v417
        %v1151 = vunpack.c.h.b16 %v417
        %v1152 = vunpack.c.l.b16 %v418
        %v1153 = vunpack.c.h.b16 %v418
        %v1154 = vunpack.c.l.b16 %v419
        %v1155 = vunpack.c.h.b16 %v419
        %v1156 = vunpack.c.l.b16 %v420
        %v1157 = vunpack.c.h.b16 %v420
        %v1158 = vunpack.c.l.b16 %v421
        %v1159 = vunpack.c.h.b16 %v421
        %v1160 = vunpack.c.l.b16 %v422
        %v1161 = vunpack.c.h.b16 %v422
        %v1162 = vunpack.c.l.b16 %v423
        %v1163 = vunpack.c.h.b16 %v423
        %v1164 = vunpack.c.l.b16 %v424
        %v1165 = vunpack.c.h.b16 %v424
        %v1166 = vunpack.c.l.b16 %v425
        %v1167 = vunpack.c.h.b16 %v425
        %v1168 = vunpack.c.l.b16 %v426
        %v1169 = vunpack.c.h.b16 %v426
        %v1170 = vunpack.c.l.b16 %v427
        %v1171 = vunpack.c.h.b16 %v427
        %v1172 = vunpack.c.l.b16 %v428
        %v1173 = vunpack.c.h.b16 %v428
        %v1174 = vunpack.c.l.b16 %v429
        %v1175 = vunpack.c.h.b16 %v429
        %v1176 = vunpack.c.l.b16 %v430
        %v1177 = vunpack.c.h.b16 %v430
        %v1178 = vunpack.c.l.b16 %v431
        %v1179 = vunpack.c.h.b16 %v431
        %v1180 = vunpack.c.l.b16 %v432
        %v1181 = vunpack.c.h.b16 %v432
        %v1182 = vunpack.c.l.b16 %v433
        %v1183 = vunpack.c.h.b16 %v433
        %v1184 = vunpack.c.l.b16 %v434
        %v1185 = vunpack.c.h.b16 %v434
        %v1186 = vunpack.c.l.b16 %v435
        %v1187 = vunpack.c.h.b16 %v435
        %v1188 = vunpack.c.l.b16 %v436
        %v1189 = vunpack.c.h.b16 %v436
        %v1190 = vunpack.c.l.b16 %v437
        %v1191 = vunpack.c.h.b16 %v437
        %v1192 = vunpack.c.l.b16 %v438
        %v1193 = vunpack.c.h.b16 %v438
        %v1194 = vunpack.c.l.b16 %v439
        %v1195 = vunpack.c.h.b16 %v439
        %v1196 = vunpack.c.l.b16 %v440
        %v1197 = vunpack.c.h.b16 %v440
        %v1198 = vunpack.c.l.b16 %v441
        %v1199 = vunpack.c.h.b16 %v441
        %v1200 = vunpack.c.l.b16 %v442
        %v1201 = vunpack.c.h.b16 %v442
        %v1202 = vunpack.c.l.b16 %v443
        %v1203 = vunpack.c.h.b16 %v443
        %v1204 = vunpack.c.l.b16 %v444
        %v1205 = vunpack.c.h.b16 %v444
        %v1206 = vunpack.c.l.b16 %v445
        %v1207 = vunpack.c.h.b16 %v445
        %v1208 = vunpack.c.l.b16 %v446
        %v1209 = vunpack.c.h.b16 %v446
        %v1210 = vunpack.c.l.b16 %v447
        %v1211 = vunpack.c.h.b16 %v447
        %v1212 = vunpack.c.l.b16 %v448
        %v1213 = vunpack.c.h.b16 %v448
        %v1214 = vunpack.c.l.b16 %v449
        %v1215 = vunpack.c.h.b16 %v449
        %v1216 = vunpack.c.l.b16 %v450
        %v1217 = vunpack.c.h.b16 %v450
        %v1218 = vunpack.c.l.b16 %v451
        %v1219 = vunpack.c.h.b16 %v451
        %v1220 = vunpack.c.l.b16 %v452
        %v1221 = vunpack.c.h.b16 %v452
        %v1222 = vunpack.c.l.b16 %v453
        %v1223 = vunpack.c.h.b16 %v453
        %v1224 = vunpack.c.l.b16 %v454
        %v1225 = vunpack.c.h.b16 %v454
        %v1226 = vunpack.c.l.b16 %v455
        %v1227 = vunpack.c.h.b16 %v455
        %v1228 = vunpack.c.l.b16 %v456
        %v1229 = vunpack.c.h.b16 %v456
        %v1230 = vunpack.c.l.b16 %v457
        %v1231 = vunpack.c.h.b16 %v457
        %v1232 = vunpack.c.l.b16 %v458
        %v1233 = vunpack.c.h.b16 %v458
        %v1234 = vunpack.c.l.b16 %v459
        %v1235 = vunpack.c.h.b16 %v459
        %v1236 = vunpack.c.l.b16 %v460
        %v1237 = vunpack.c.h.b16 %v460
        %v1238 = vunpack.c.l.b16 %v461
        %v1239 = vunpack.c.h.b16 %v461
        %v1240 = vunpack.c.l.b16 %v462
        %v1241 = vunpack.c.h.b16 %v462
        %v1242 = vunpack.c.l.b16 %v463
        %v1243 = vunpack.c.h.b16 %v463
        %v1244 = vunpack.c.l.b16 %v464
        %v1245 = vunpack.c.h.b16 %v464
        %v1246 = vunpack.c.l.b16 %v465
        %v1247 = vunpack.c.h.b16 %v465
        %v1248 = vunpack.c.l.b16 %v466
        %v1249 = vunpack.c.h.b16 %v466
        %v1250 = vunpack.c.l.b16 %v467
        %v1251 = vunpack.c.h.b16 %v467
        %v1252 = vunpack.c.l.b16 %v468
        %v1253 = vunpack.c.h.b16 %v468
        %v1254 = vunpack.c.l.b16 %v469
        %v1255 = vunpack.c.h.b16 %v469
        %v1256 = vunpack.c.l.b16 %v470
        %v1257 = vunpack.c.h.b16 %v470
        %v1258 = vunpack.c.l.b16 %v471
        %v1259 = vunpack.c.h.b16 %v471
        %v1260 = vunpack.c.l.b16 %v472
        %v1261 = vunpack.c.h.b16 %v472
        %v1262 = vunpack.c.l.b16 %v473
        %v1263 = vunpack.c.h.b16 %v473
        %v1264 = vunpack.c.l.b16 %v474
        %v1265 = vunpack.c.h.b16 %v474
        %v1266 = vunpack.c.l.b16 %v475
        %v1267 = vunpack.c.h.b16 %v475
        %v1268 = vunpack.c.l.b16 %v476
        %v1269 = vunpack.c.h.b16 %v476
        %v1270 = vunpack.c.l.b16 %v477
        %v1271 = vunpack.c.h.b16 %v477
        %v1272 = vunpack.c.l.b16 %v478
        %v1273 = vunpack.c.h.b16 %v478
        %v1274 = vunpack.c.l.b16 %v479
        %v1275 = vunpack.c.h.b16 %v479
        %v1276 = vunpack.c.l.b16 %v480
        %v1277 = vunpack.c.h.b16 %v480
        %v1278 = vunpack.c.l.b16 %v481
        %v1279 = vunpack.c.h.b16 %v481
        %v1280 = vunpack.c.l.b16 %v482
        %v1281 = vunpack.c.h.b16 %v482
        %v1282 = vunpack.c.l.b16 %v483
        %v1283 = vunpack.c.h.b16 %v483
        %v1284 = vunpack.c.l.b16 %v484
        %v1285 = vunpack.c.h.b16 %v484
        %v1286 = vunpack.c.l.b16 %v485
        %v1287 = vunpack.c.h.b16 %v485
        %v1288 = vunpack.c.l.b16 %v486
        %v1289 = vunpack.c.h.b16 %v486
        %v1290 = vunpack.c.l.b16 %v487
        %v1291 = vunpack.c.h.b16 %v487
        %v1292 = vunpack.c.l.b16 %v488
        %v1293 = vunpack.c.h.b16 %v488
        %v1294 = vunpack.c.l.b16 %v489
        %v1295 = vunpack.c.h.b16 %v489
        %v1296 = vunpack.c.l.b16 %v490
        %v1297 = vunpack.c.h.b16 %v490
        %v1298 = vunpack.c.l.b16 %v491
        %v1299 = vunpack.c.h.b16 %v491
        %v1300 = vunpack.c.l.b16 %v492
        %v1301 = vunpack.c.h.b16 %v492
        %v1302 = vunpack.c.l.b16 %v493
        %v1303 = vunpack.c.h.b16 %v493
        %v1304 = vunpack.c.l.b16 %v494
        %v1305 = vunpack.c.h.b16 %v494
        %v1306 = vunpack.c.l.b16 %v495
        %v1307 = vunpack.c.h.b16 %v495
        %v1308 = vunpack.c.l.b16 %v496
        %v1309 = vunpack.c.h.b16 %v496
        %v1310 = vunpack.c.l.b16 %v497
        %v1311 = vunpack.c.h.b16 %v497
        %v1312 = vunpack.c.l.b16 %v498
        %v1313 = vunpack.c.h.b16 %v498
        %v1314 = vunpack.c.l.b16 %v499
        %v1315 = vunpack.c.h.b16 %v499
        %v1316 = vunpack.c.l.b16 %v500
        %v1317 = vunpack.c.h.b16 %v500
        %v1318 = vunpack.c.l.b16 %v501
        %v1319 = vunpack.c.h.b16 %v501
        %v1320 = vunpack.c.l.b16 %v502
        %v1321 = vunpack.c.h.b16 %v502
        %v1322 = vunpack.c.l.b16 %v503
        %v1323 = vunpack.c.h.b16 %v503
        %v1324 = vunpack.c.l.b16 %v504
        %v1325 = vunpack.c.h.b16 %v504
        %v1326 = vunpack.c.l.b16 %v505
        %v1327 = vunpack.c.h.b16 %v505
        %v1328 = vunpack.c.l.b16 %v506
        %v1329 = vunpack.c.h.b16 %v506
        %v1330 = vunpack.c.l.b16 %v507
        %v1331 = vunpack.c.h.b16 %v507
        %v1332 = vunpack.c.l.b16 %v508
        %v1333 = vunpack.c.h.b16 %v508
        %v1334 = vunpack.c.l.b16 %v509
        %v1335 = vunpack.c.h.b16 %v509
        %v1336 = vunpack.c.l.b16 %v510
        %v1337 = vunpack.c.h.b16 %v510
        %v1338 = vunpack.c.l.b16 %v511
        %v1339 = vunpack.c.h.b16 %v511
        %v1340 = vunpack.c.l.b16 %v512
        %v1341 = vunpack.c.h.b16 %v512
        %v1342 = vunpack.c.l.b16 %v513
        %v1343 = vunpack.c.h.b16 %v513
        %v1344 = vunpack.c.l.b16 %v514
        %v1345 = vunpack.c.h.b16 %v514
        %v1346 = vunpack.c.l.b16 %v515
        %v1347 = vunpack.c.h.b16 %v515
        %v1348 = vunpack.c.l.b16 %v516
        %v1349 = vunpack.c.h.b16 %v516
        %v1350 = vunpack.c.l.b16 %v517
        %v1351 = vunpack.c.h.b16 %v517
        %v1352 = vunpack.c.l.b16 %v518
        %v1353 = vunpack.c.h.b16 %v518
        %v1354 = vunpack.c.l.b16 %v519
        %v1355 = vunpack.c.h.b16 %v519
        %v1356 = vunpack.c.l.b16 %v520
        %v1357 = vunpack.c.h.b16 %v520
        %v1358 = vunpack.c.l.b16 %v521
        %v1359 = vunpack.c.h.b16 %v521
        %v1360 = vunpack.c.l.b16 %v522
        %v1361 = vunpack.c.h.b16 %v522
        %v1362 = vunpack.c.l.b16 %v523
        %v1363 = vunpack.c.h.b16 %v523
        %v1364 = vunpack.c.l.b16 %v524
        %v1365 = vunpack.c.h.b16 %v524
        %v1366 = vunpack.c.l.b16 %v525
        %v1367 = vunpack.c.h.b16 %v525
        %v1368 = vunpack.c.l.b16 %v526
        %v1369 = vunpack.c.h.b16 %v526
        %v1370 = vunpack.c.l.b16 %v527
        %v1371 = vunpack.c.h.b16 %v527
        %v1372 = vunpack.c.l.b16 %v528
        %v1373 = vunpack.c.h.b16 %v528
        %v1374 = vunpack.c.l.b16 %v529
        %v1375 = vunpack.c.h.b16 %v529
        %v1376 = vunpack.c.l.b16 %v530
        %v1377 = vunpack.c.h.b16 %v530
        %v1378 = vunpack.c.l.b16 %v531
        %v1379 = vunpack.c.h.b16 %v531
        %v1380 = vunpack.c.l.b16 %v532
        %v1381 = vunpack.c.h.b16 %v532
        %v1382 = vunpack.c.l.b16 %v533
        %v1383 = vunpack.c.h.b16 %v533
        %v1384 = vunpack.c.l.b16 %v534
        %v1385 = vunpack.c.h.b16 %v534
        %v1386 = vunpack.c.l.b16 %v535
        %v1387 = vunpack.c.h.b16 %v535
        %v1388 = vunpack.c.l.b16 %v536
        %v1389 = vunpack.c.h.b16 %v536
        %v1390 = vunpack.c.l.b16 %v537
        %v1391 = vunpack.c.h.b16 %v537
        %v1392 = vunpack.c.l.b16 %v538
        %v1393 = vunpack.c.h.b16 %v538
        %v1394 = vunpack.c.l.b16 %v539
        %v1395 = vunpack.c.h.b16 %v539
        %v1396 = vunpack.c.l.b16 %v540
        %v1397 = vunpack.c.h.b16 %v540
        %v1398 = vunpack.c.l.b16 %v541
        %v1399 = vunpack.c.h.b16 %v541
        %v1400 = vunpack.c.l.b16 %v542
        %v1401 = vunpack.c.h.b16 %v542
        %v1402 = vunpack.c.l.b16 %v543
        %v1403 = vunpack.c.h.b16 %v543
        %v1404 = vunpack.c.l.b16 %v544
        %v1405 = vunpack.c.h.b16 %v544
        %v1406 = vunpack.c.l.b16 %v545
        %v1407 = vunpack.c.h.b16 %v545
        %v1408 = vunpack.c.l.b16 %v546
        %v1409 = vunpack.c.h.b16 %v546
        %v1410 = vunpack.c.l.b16 %v547
        %v1411 = vunpack.c.h.b16 %v547
        %v1412 = vunpack.c.l.b16 %v548
        %v1413 = vunpack.c.h.b16 %v548
        %v1414 = vunpack.c.l.b16 %v549
        %v1415 = vunpack.c.h.b16 %v549
        %v1416 = vunpack.c.l.b16 %v550
        %v1417 = vunpack.c.h.b16 %v550
        %v1418 = vunpack.c.l.b16 %v551
        %v1419 = vunpack.c.h.b16 %v551
        %v1420 = vunpack.c.l.b16 %v552
        %v1421 = vunpack.c.h.b16 %v552
        %v1422 = vunpack.c.l.b16 %v553
        %v1423 = vunpack.c.h.b16 %v553
        %v1424 = vunpack.c.l.b16 %v554
        %v1425 = vunpack.c.h.b16 %v554
        %v1426 = vunpack.c.l.b16 %v555
        %v1427 = vunpack.c.h.b16 %v555
        %v1428 = vunpack.c.l.b16 %v556
        %v1429 = vunpack.c.h.b16 %v556
        %v1430 = vunpack.c.l.b16 %v557
        %v1431 = vunpack.c.h.b16 %v557
        %v1432 = vunpack.c.l.b16 %v558
        %v1433 = vunpack.c.h.b16 %v558
        %v1434 = vunpack.c.l.b16 %v559
        %v1435 = vunpack.c.h.b16 %v559
        %v1436 = vunpack.c.l.b16 %v560
        %v1437 = vunpack.c.h.b16 %v560
        %v1438 = vunpack.c.l.b16 %v561
        %v1439 = vunpack.c.h.b16 %v561
        %v1440 = vunpack.c.l.b16 %v562
        %v1441 = vunpack.c.h.b16 %v562
        %v1442 = vunpack.c.l.b16 %v563
        %v1443 = vunpack.c.h.b16 %v563
        %v1444 = vpack.c.b16 %v1126, %v1124
        %v1445 = vpack.c.b16 %v1127, %v1125
        %v1446 = vpack.c.b16 %v1130, %v1128
        %v1447 = vpack.c.b16 %v1131, %v1129
        %v1448 = vpack.c.b16 %v1134, %v1132
        %v1449 = vpack.c.b16 %v1135, %v1133
        %v1450 = vpack.c.b16 %v1138, %v1136
        %v1451 = vpack.c.b16 %v1139, %v1137
        %v1452 = vpack.c.b16 %v1142, %v1140
        %v1453 = vpack.c.b16 %v1143, %v1141
        %v1454 = vpack.c.b16 %v1146, %v1144
        %v1455 = vpack.c.b16 %v1147, %v1145
        %v1456 = vpack.c.b16 %v1150, %v1148
        %v1457 = vpack.c.b16 %v1151, %v1149
        %v1458 = vpack.c.b16 %v1154, %v1152
        %v1459 = vpack.c.b16 %v1155, %v1153
        %v1460 = vpack.c.b16 %v1158, %v1156
        %v1461 = vpack.c.b16 %v1159, %v1157
        %v1462 = vpack.c.b16 %v1162, %v1160
        %v1463 = vpack.c.b16 %v1163, %v1161
        %v1464 = vpack.c.b16 %v1166, %v1164
        %v1465 = vpack.c.b16 %v1167, %v1165
        %v1466 = vpack.c.b16 %v1170, %v1168
        %v1467 = vpack.c.b16 %v1171, %v1169
        %v1468 = vpack.c.b16 %v1174, %v1172
        %v1469 = vpack.c.b16 %v1175, %v1173
        %v1470 = vpack.c.b16 %v1178, %v1176
        %v1471 = vpack.c.b16 %v1179, %v1177
        %v1472 = vpack.c.b16 %v1182, %v1180
        %v1473 = vpack.c.b16 %v1183, %v1181
        %v1474 = vpack.c.b16 %v1186, %v1184
        %v1475 = vpack.c.b16 %v1187, %v1185
        %v1476 = vpack.c.b16 %v1190, %v1188
        %v1477 = vpack.c.b16 %v1191, %v1189
        %v1478 = vpack.c.b16 %v1194, %v1192
        %v1479 = vpack.c.b16 %v1195, %v1193
        %v1480 = vpack.c.b16 %v1198, %v1196
        %v1481 = vpack.c.b16 %v1199, %v1197
        %v1482 = vpack.c.b16 %v1202, %v1200
        %v1483 = vpack.c.b16 %v1203, %v1201
        %v1484 = vpack.c.b16 %v1206, %v1204
        %v1485 = vpack.c.b16 %v1207, %v1205
        %v1486 = vpack.c.b16 %v1210, %v1208
        %v1487 = vpack.c.b16 %v1211, %v1209
        %v1488 = vpack.c.b16 %v1214, %v1212
        %v1489 = vpack.c.b16 %v1215, %v1213
        %v1490 = vpack.c.b16 %v1218, %v1216
        %v1491 = vpack.c.b16 %v1219, %v1217
        %v1492 = vpack.c.b16 %v1222, %v1220
        %v1493 = vpack.c.b16 %v1223, %v1221
        %v1494 = vpack.c.b16 %v1226, %v1224
        %v1495 = vpack.c.b16 %v1227, %v1225
        %v1496 = vpack.c.b16 %v1230, %v1228
        %v1497 = vpack.c.b16 %v1231, %v1229
        %v1498 = vpack.c.b16 %v1234, %v1232
        %v1499 = vpack.c.b16 %v1235, %v1233
        %v1500 = vpack.c.b16 %v1238, %v1236
        %v1501 = vpack.c.b16 %v1239, %v1237
        %v1502 = vpack.c.b16 %v1242, %v1240
        %v1503 = vpack.c.b16 %v1243, %v1241
        %v1504 = vpack.c.b16 %v1246, %v1244
        %v1505 = vpack.c.b16 %v1247, %v1245
        %v1506 = vpack.c.b16 %v1250, %v1248
        %v1507 = vpack.c.b16 %v1251, %v1249
        %v1508 = vpack.c.b16 %v1254, %v1252
        %v1509 = vpack.c.b16 %v1255, %v1253
        %v1510 = vpack.c.b16 %v1258, %v1256
        %v1511 = vpack.c.b16 %v1259, %v1257
        %v1512 = vpack.c.b16 %v1262, %v1260
        %v1513 = vpack.c.b16 %v1263, %v1261
        %v1514 = vpack.c.b16 %v1266, %v1264
        %v1515 = vpack.c.b16 %v1267, %v1265
        %v1516 = vpack.c.b16 %v1270, %v1268
        %v1517 = vpack.c.b16 %v1271, %v1269
        %v1518 = vpack.c.b16 %v1274, %v1272
        %v1519 = vpack.c.b16 %v1275, %v1273
        %v1520 = vpack.c.b16 %v1278, %v1276
        %v1521 = vpack.c.b16 %v1279, %v1277
        %v1522 = vpack.c.b16 %v1282, %v1280
        %v1523 = vpack.c.b16 %v1283, %v1281
        %v1524 = vpack.c.b16 %v1286, %v1284
        %v1525 = vpack.c.b16 %v1287, %v1285
        %v1526 = vpack.c.b16 %v1290, %v1288
        %v1527 = vpack.c.b16 %v1291, %v1289
        %v1528 = vpack.c.b16 %v1294, %v1292
        %v1529 = vpack.c.b16 %v1295, %v1293
        %v1530 = vpack.c.b16 %v1298, %v1296
        %v1531 = vpack.c.b16 %v1299, %v1297
        %v1532 = vpack.c.b16 %v1302, %v1300
        %v1533 = vpack.c.b16 %v1303, %v1301
        %v1534 = vpack.c.b16 %v1306, %v1304
        %v1535 = vpack.c.b16 %v1307, %v1305
        %v1536 = vpack.c.b16 %v1310, %v1308
        %v1537 = vpack.c.b16 %v1311, %v1309
        %v1538 = vpack.c.b16 %v1314, %v1312
        %v1539 = vpack.c.b16 %v1315, %v1313
        %v1540 = vpack.c.b16 %v1318, %v1316
        %v1541 = vpack.c.b16 %v1319, %v1317
        %v1542 = vpack.c.b16 %v1322, %v1320
        %v1543 = vpack.c.b16 %v1323, %v1321
        %v1544 = vpack.c.b16 %v1326, %v1324
        %v1545 = vpack.c.b16 %v1327, %v1325
        %v1546 = vpack.c.b16 %v1330, %v1328
        %v1547 = vpack.c.b16 %v1331, %v1329
        %v1548 = vpack.c.b16 %v1334, %v1332
        %v1549 = vpack.c.b16 %v1335, %v1333
        %v1550 = vpack.c.b16 %v1338, %v1336
        %v1551 = vpack.c.b16 %v1339, %v1337
        %v1552 = vpack.c.b16 %v1342, %v1340
        %v1553 = vpack.c.b16 %v1343, %v1341
        %v1554 = vpack.c.b16 %v1346, %v1344
        %v1555 = vpack.c.b16 %v1347, %v1345
        %v1556 = vpack.c.b16 %v1350, %v1348
        %v1557 = vpack.c.b16 %v1351, %v1349
        %v1558 = vpack.c.b16 %v1354, %v1352
        %v1559 = vpack.c.b16 %v1355, %v1353
        %v1560 = vpack.c.b16 %v1358, %v1356
        %v1561 = vpack.c.b16 %v1359, %v1357
        %v1562 = vpack.c.b16 %v1362, %v1360
        %v1563 = vpack.c.b16 %v1363, %v1361
        %v1564 = vpack.c.b16 %v1366, %v1364
        %v1565 = vpack.c.b16 %v1367, %v1365
        %v1566 = vpack.c.b16 %v1370, %v1368
        %v1567 = vpack.c.b16 %v1371, %v1369
        %v1568 = vpack.c.b16 %v1374, %v1372
        %v1569 = vpack.c.b16 %v1375, %v1373
        %v1570 = vpack.c.b16 %v1378, %v1376
        %v1571 = vpack.c.b16 %v1379, %v1377
        %v1572 = vpack.c.b16 %v1382, %v1380
        %v1573 = vpack.c.b16 %v1383, %v1381
        %v1574 = vpack.c.b16 %v1386, %v1384
        %v1575 = vpack.c.b16 %v1387, %v1385
        %v1576 = vpack.c.b16 %v1390, %v1388
        %v1577 = vpack.c.b16 %v1391, %v1389
        %v1578 = vpack.c.b16 %v1394, %v1392
        %v1579 = vpack.c.b16 %v1395, %v1393
        %v1580 = vpack.c.b16 %v1398, %v1396
        %v1581 = vpack.c.b16 %v1399, %v1397
        %v1582 = vpack.c.b16 %v1402, %v1400
        %v1583 = vpack.c.b16 %v1403, %v1401
        %v1584 = vpack.c.b16 %v1406, %v1404
        %v1585 = vpack.c.b16 %v1407, %v1405
        %v1586 = vpack.c.b16 %v1410, %v1408
        %v1587 = vpack.c.b16 %v1411, %v1409
        %v1588 = vpack.c.b16 %v1414, %v1412
        %v1589 = vpack.c.b16 %v1415, %v1413
        %v1590 = vpack.c.b16 %v1418, %v1416
        %v1591 = vpack.c.b16 %v1419, %v1417
        %v1592 = vpack.c.b16 %v1422, %v1420
        %v1593 = vpack.c.b16 %v1423, %v1421
        %v1594 = vpack.c.b16 %v1426, %v1424
        %v1595 = vpack.c.b16 %v1427, %v1425
        %v1596 = vpack.c.b16 %v1430, %v1428
        %v1597 = vpack.c.b16 %v1431, %v1429
        %v1598 = vpack.c.b16 %v1434, %v1432
        %v1599 = vpack.c.b16 %v1435, %v1433
        %v1600 = vpack.c.b16 %v1438, %v1436
        %v1601 = vpack.c.b16 %v1439, %v1437
        %v1602 = vpack.c.b16 %v1442, %v1440
        %v1603 = vpack.c.b16 %v1443, %v1441
        %1764 = vmatprep.subr.bf16.mxu0 %v1445
        %1765 = vmatpush1.bf16.msra.mxu0 %v1444
        %1766 = vmatprep.subr.bf16.mxu0 %v1447
        %1767 = vmatpush1.bf16.msra.mxu0 %v1446
        %1768 = vmatprep.subr.bf16.mxu0 %v1449
        %1769 = vmatpush1.bf16.msra.mxu0 %v1448
        %1770 = vmatprep.subr.bf16.mxu0 %v1451
        %1771 = vmatpush1.bf16.msra.mxu0 %v1450
        %1772 = vmatprep.subr.bf16.mxu0 %v1453
        %1773 = vmatpush1.bf16.msra.mxu0 %v1452
        %1774 = vmatprep.subr.bf16.mxu0 %v1455
        %1775 = vmatpush1.bf16.msra.mxu0 %v1454
        %1776 = vmatprep.subr.bf16.mxu0 %v1457
        %1777 = vmatpush1.bf16.msra.mxu0 %v1456
        %1778 = vmatprep.subr.bf16.mxu0 %v1459
        %1779 = vmatpush1.bf16.msra.mxu0 %v1458
        %1780 = vmatprep.subr.bf16.mxu0 %v1461
        %1781 = vmatpush1.bf16.msra.mxu0 %v1460
        %1782 = vmatprep.subr.bf16.mxu0 %v1463
        %1783 = vmatpush1.bf16.msra.mxu0 %v1462
        %1784 = vmatprep.subr.bf16.mxu0 %v1465
        %1785 = vmatpush1.bf16.msra.mxu0 %v1464
        %1786 = vmatprep.subr.bf16.mxu0 %v1467
        %1787 = vmatpush1.bf16.msra.mxu0 %v1466
        %1788 = vmatprep.subr.bf16.mxu0 %v1469
        %1789 = vmatpush1.bf16.msra.mxu0 %v1468
        %1790 = vmatprep.subr.bf16.mxu0 %v1471
        %1791 = vmatpush1.bf16.msra.mxu0 %v1470
        %1792 = vmatprep.subr.bf16.mxu0 %v1473
        %1793 = vmatpush1.bf16.msra.mxu0 %v1472
        %1794 = vmatprep.subr.bf16.mxu0 %v1475
        %1795 = vmatpush1.bf16.msra.mxu0 %v1474
        %1796 = vmatprep.mubr.bf16.mxu0 %v805
        %1797 = vmatmul.mubr.bf16.gmra.mrb[0].mxu0 %v804
        %v1798 = vpop.f32.mrb[0].mxu0
        %v1799 = vadd.f32 0.0, %v1798
        %v1800 = vpop.f32.mrb[0].mxu0
        %v1801 = vadd.f32 0.0, %v1800
        %v1802 = vpop.f32.mrb[0].mxu0
        %v1803 = vadd.f32 0.0, %v1802
        %v1804 = vpop.f32.mrb[0].mxu0
        %v1805 = vadd.f32 0.0, %v1804
        %1806 = vmatprep.mubr.bf16.mxu0 %v815
        %1807 = vmatmul.mubr.bf16.gmra.mrb[0].mxu0 %v814
        %v1808 = vpop.f32.mrb[0].mxu0
        %v1809 = vadd.f32 0.0, %v1808
        %v1810 = vpop.f32.mrb[0].mxu0
        %v1811 = vadd.f32 0.0, %v1810
        %v1812 = vpop.f32.mrb[0].mxu0
        %v1813 = vadd.f32 0.0, %v1812
        %v1814 = vpop.f32.mrb[0].mxu0
        %v1815 = vadd.f32 0.0, %v1814
        %1816 = vmatprep.mubr.bf16.mxu0 %v825
        %1817 = vmatmul.mubr.bf16.gmra.mrb[0].mxu0 %v824
        %v1818 = vpop.f32.mrb[0].mxu0
        %v1819 = vadd.f32 0.0, %v1818
        %v1820 = vpop.f32.mrb[0].mxu0
        %v1821 = vadd.f32 0.0, %v1820
        %v1822 = vpop.f32.mrb[0].mxu0
        %v1823 = vadd.f32 0.0, %v1822
        %v1824 = vpop.f32.mrb[0].mxu0
        %v1825 = vadd.f32 0.0, %v1824
        %1826 = vmatprep.mubr.bf16.mxu0 %v835
        %1827 = vmatmul.mubr.bf16.gmra.mrb[0].mxu0 %v834
        %v1828 = vpop.f32.mrb[0].mxu0
        %v1829 = vadd.f32 0.0, %v1828
        %v1830 = vpop.f32.mrb[0].mxu0
        %v1831 = vadd.f32 0.0, %v1830
        %v1832 = vpop.f32.mrb[0].mxu0
        %v1833 = vadd.f32 0.0, %v1832
        %v1834 = vpop.f32.mrb[0].mxu0
        %v1835 = vadd.f32 0.0, %v1834
        %1836 = vmatprep.mubr.bf16.mxu0 %v845
        %1837 = vmatmul.mubr.bf16.gmra.mrb[0].mxu0 %v844
        %v1838 = vpop.f32.mrb[0].mxu0
        %v1839 = vadd.f32 0.0, %v1838
        %v1840 = vpop.f32.mrb[0].mxu0
        %v1841 = vadd.f32 0.0, %v1840
        %v1842 = vpop.f32.mrb[0].mxu0
        %v1843 = vadd.f32 0.0, %v1842
        %v1844 = vpop.f32.mrb[0].mxu0
        %v1845 = vadd.f32 0.0, %v1844
        %1846 = vmatprep.mubr.bf16.mxu0 %v855
        %1847 = vmatmul.mubr.bf16.gmra.mrb[0].mxu0 %v854
        %v1848 = vpop.f32.mrb[0].mxu0
        %v1849 = vadd.f32 0.0, %v1848
        %v1850 = vpop.f32.mrb[0].mxu0
        %v1851 = vadd.f32 0.0, %v1850
        %v1852 = vpop.f32.mrb[0].mxu0
        %v1853 = vadd.f32 0.0, %v1852
        %v1854 = vpop.f32.mrb[0].mxu0
        %v1855 = vadd.f32 0.0, %v1854
        %1856 = vmatprep.mubr.bf16.mxu0 %v865
        %1857 = vmatmul.mubr.bf16.gmra.mrb[0].mxu0 %v864
        %v1858 = vpop.f32.mrb[0].mxu0
        %v1859 = vadd.f32 0.0, %v1858
        %v1860 = vpop.f32.mrb[0].mxu0
        %v1861 = vadd.f32 0.0, %v1860
        %v1862 = vpop.f32.mrb[0].mxu0
        %v1863 = vadd.f32 0.0, %v1862
        %v1864 = vpop.f32.mrb[0].mxu0
        %v1865 = vadd.f32 0.0, %v1864
        %1866 = vmatprep.mubr.bf16.mxu0 %v875
        %1867 = vmatmul.mubr.bf16.gmra.mrb[0].mxu0 %v874
        %v1868 = vpop.f32.mrb[0].mxu0
        %v1869 = vadd.f32 0.0, %v1868
        %v1870 = vpop.f32.mrb[0].mxu0
        %v1871 = vadd.f32 0.0, %v1870
        %v1872 = vpop.f32.mrb[0].mxu0
        %v1873 = vadd.f32 0.0, %v1872
        %v1874 = vpop.f32.mrb[0].mxu0
        %v1875 = vadd.f32 0.0, %v1874
        %1876 = vdwg.mxu0
        %1877 = vmatprep.subr.bf16.mxu0 %v1477
        %1878 = vmatpush1.bf16.msra.mxu0 %v1476
        %1879 = vmatprep.subr.bf16.mxu0 %v1479
        %1880 = vmatpush1.bf16.msra.mxu0 %v1478
        %1881 = vmatprep.subr.bf16.mxu0 %v1481
        %1882 = vmatpush1.bf16.msra.mxu0 %v1480
        %1883 = vmatprep.subr.bf16.mxu0 %v1483
        %1884 = vmatpush1.bf16.msra.mxu0 %v1482
        %1885 = vmatprep.subr.bf16.mxu0 %v1485
        %1886 = vmatpush1.bf16.msra.mxu0 %v1484
        %1887 = vmatprep.subr.bf16.mxu0 %v1487
        %1888 = vmatpush1.bf16.msra.mxu0 %v1486
        %1889 = vmatprep.subr.bf16.mxu0 %v1489
        %1890 = vmatpush1.bf16.msra.mxu0 %v1488
        %1891 = vmatprep.subr.bf16.mxu0 %v1491
        %1892 = vmatpush1.bf16.msra.mxu0 %v1490
        %1893 = vmatprep.subr.bf16.mxu0 %v1493
        %1894 = vmatpush1.bf16.msra.mxu0 %v1492
        %1895 = vmatprep.subr.bf16.mxu0 %v1495
        %1896 = vmatpush1.bf16.msra.mxu0 %v1494
        %1897 = vmatprep.subr.bf16.mxu0 %v1497
        %1898 = vmatpush1.bf16.msra.mxu0 %v1496
        %1899 = vmatprep.subr.bf16.mxu0 %v1499
        %1900 = vmatpush1.bf16.msra.mxu0 %v1498
        %1901 = vmatprep.subr.bf16.mxu0 %v1501
        %1902 = vmatpush1.bf16.msra.mxu0 %v1500
        %1903 = vmatprep.subr.bf16.mxu0 %v1503
        %1904 = vmatpush1.bf16.msra.mxu0 %v1502
        %1905 = vmatprep.subr.bf16.mxu0 %v1505
        %1906 = vmatpush1.bf16.msra.mxu0 %v1504
        %1907 = vmatprep.subr.bf16.mxu0 %v1507
        %1908 = vmatpush1.bf16.msra.mxu0 %v1506
        %1909 = vmatprep.mubr.bf16.mxu0 %v807
        %1910 = vmatmul.mubr.bf16.gmra.mrb[0].mxu0 %v806
        %v1911 = vpop.f32.mrb[0].mxu0
        %v1912 = vadd.f32 %v1799, %v1911
        %v1913 = vpop.f32.mrb[0].mxu0
        %v1914 = vadd.f32 %v1801, %v1913
        %v1915 = vpop.f32.mrb[0].mxu0
        %v1916 = vadd.f32 %v1803, %v1915
        %v1917 = vpop.f32.mrb[0].mxu0
        %v1918 = vadd.f32 %v1805, %v1917
        %1919 = vmatprep.mubr.bf16.mxu0 %v817
        %1920 = vmatmul.mubr.bf16.gmra.mrb[0].mxu0 %v816
        %v1921 = vpop.f32.mrb[0].mxu0
        %v1922 = vadd.f32 %v1809, %v1921
        %v1923 = vpop.f32.mrb[0].mxu0
        %v1924 = vadd.f32 %v1811, %v1923
        %v1925 = vpop.f32.mrb[0].mxu0
        %v1926 = vadd.f32 %v1813, %v1925
        %v1927 = vpop.f32.mrb[0].mxu0
        %v1928 = vadd.f32 %v1815, %v1927
        %1929 = vmatprep.mubr.bf16.mxu0 %v827
        %1930 = vmatmul.mubr.bf16.gmra.mrb[0].mxu0 %v826
        %v1931 = vpop.f32.mrb[0].mxu0
        %v1932 = vadd.f32 %v1819, %v1931
        %v1933 = vpop.f32.mrb[0].mxu0
        %v1934 = vadd.f32 %v1821, %v1933
        %v1935 = vpop.f32.mrb[0].mxu0
        %v1936 = vadd.f32 %v1823, %v1935
        %v1937 = vpop.f32.mrb[0].mxu0
        %v1938 = vadd.f32 %v1825, %v1937
        %1939 = vmatprep.mubr.bf16.mxu0 %v837
        %1940 = vmatmul.mubr.bf16.gmra.mrb[0].mxu0 %v836
        %v1941 = vpop.f32.mrb[0].mxu0
        %v1942 = vadd.f32 %v1829, %v1941
        %v1943 = vpop.f32.mrb[0].mxu0
        %v1944 = vadd.f32 %v1831, %v1943
        %v1945 = vpop.f32.mrb[0].mxu0
        %v1946 = vadd.f32 %v1833, %v1945
        %v1947 = vpop.f32.mrb[0].mxu0
        %v1948 = vadd.f32 %v1835, %v1947
        %1949 = vmatprep.mubr.bf16.mxu0 %v847
        %1950 = vmatmul.mubr.bf16.gmra.mrb[0].mxu0 %v846
        %v1951 = vpop.f32.mrb[0].mxu0
        %v1952 = vadd.f32 %v1839, %v1951
        %v1953 = vpop.f32.mrb[0].mxu0
        %v1954 = vadd.f32 %v1841, %v1953
        %v1955 = vpop.f32.mrb[0].mxu0
        %v1956 = vadd.f32 %v1843, %v1955
        %v1957 = vpop.f32.mrb[0].mxu0
        %v1958 = vadd.f32 %v1845, %v1957
        %1959 = vmatprep.mubr.bf16.mxu0 %v857
        %1960 = vmatmul.mubr.bf16.gmra.mrb[0].mxu0 %v856
        %v1961 = vpop.f32.mrb[0].mxu0
        %v1962 = vadd.f32 %v1849, %v1961
        %v1963 = vpop.f32.mrb[0].mxu0
        %v1964 = vadd.f32 %v1851, %v1963
        %v1965 = vpop.f32.mrb[0].mxu0
        %v1966 = vadd.f32 %v1853, %v1965
        %v1967 = vpop.f32.mrb[0].mxu0
        %v1968 = vadd.f32 %v1855, %v1967
        %1969 = vmatprep.mubr.bf16.mxu0 %v867
        %1970 = vmatmul.mubr.bf16.gmra.mrb[0].mxu0 %v866
        %v1971 = vpop.f32.mrb[0].mxu0
        %v1972 = vadd.f32 %v1859, %v1971
        %v1973 = vpop.f32.mrb[0].mxu0
        %v1974 = vadd.f32 %v1861, %v1973
        %v1975 = vpop.f32.mrb[0].mxu0
        %v1976 = vadd.f32 %v1863, %v1975
        %v1977 = vpop.f32.mrb[0].mxu0
        %v1978 = vadd.f32 %v1865, %v1977
        %1979 = vmatprep.mubr.bf16.mxu0 %v877
        %1980 = vmatmul.mubr.bf16.gmra.mrb[0].mxu0 %v876
        %v1981 = vpop.f32.mrb[0].mxu0
        %v1982 = vadd.f32 %v1869, %v1981
        %v1983 = vpop.f32.mrb[0].mxu0
        %v1984 = vadd.f32 %v1871, %v1983
        %v1985 = vpop.f32.mrb[0].mxu0
        %v1986 = vadd.f32 %v1873, %v1985
        %v1987 = vpop.f32.mrb[0].mxu0
        %v1988 = vadd.f32 %v1875, %v1987
        %1989 = vdwg.mxu0
        %1990 = vmatprep.subr.bf16.mxu0 %v1509
        %1991 = vmatpush1.bf16.msra.mxu0 %v1508
        %1992 = vmatprep.subr.bf16.mxu0 %v1511
        %1993 = vmatpush1.bf16.msra.mxu0 %v1510
        %1994 = vmatprep.subr.bf16.mxu0 %v1513
        %1995 = vmatpush1.bf16.msra.mxu0 %v1512
        %1996 = vmatprep.subr.bf16.mxu0 %v1515
        %1997 = vmatpush1.bf16.msra.mxu0 %v1514
        %1998 = vmatprep.subr.bf16.mxu0 %v1517
        %1999 = vmatpush1.bf16.msra.mxu0 %v1516
        %2000 = vmatprep.subr.bf16.mxu0 %v1519
        %2001 = vmatpush1.bf16.msra.mxu0 %v1518
        %2002 = vmatprep.subr.bf16.mxu0 %v1521
        %2003 = vmatpush1.bf16.msra.mxu0 %v1520
        %2004 = vmatprep.subr.bf16.mxu0 %v1523
        %2005 = vmatpush1.bf16.msra.mxu0 %v1522
        %2006 = vmatprep.subr.bf16.mxu0 %v1525
        %2007 = vmatpush1.bf16.msra.mxu0 %v1524
        %2008 = vmatprep.subr.bf16.mxu0 %v1527
        %2009 = vmatpush1.bf16.msra.mxu0 %v1526
        %2010 = vmatprep.subr.bf16.mxu0 %v1529
        %2011 = vmatpush1.bf16.msra.mxu0 %v1528
        %2012 = vmatprep.subr.bf16.mxu0 %v1531
        %2013 = vmatpush1.bf16.msra.mxu0 %v1530
        %2014 = vmatprep.subr.bf16.mxu0 %v1533
        %2015 = vmatpush1.bf16.msra.mxu0 %v1532
        %2016 = vmatprep.subr.bf16.mxu0 %v1535
        %2017 = vmatpush1.bf16.msra.mxu0 %v1534
        %2018 = vmatprep.subr.bf16.mxu0 %v1537
        %2019 = vmatpush1.bf16.msra.mxu0 %v1536
        %2020 = vmatprep.subr.bf16.mxu0 %v1539
        %2021 = vmatpush1.bf16.msra.mxu0 %v1538
        %2022 = vmatprep.mubr.bf16.mxu0 %v809
        %2023 = vmatmul.mubr.bf16.gmra.mrb[0].mxu0 %v808
        %v2024 = vpop.f32.mrb[0].mxu0
        %v2025 = vadd.f32 %v1912, %v2024
        %v2026 = vpop.f32.mrb[0].mxu0
        %v2027 = vadd.f32 %v1914, %v2026
        %v2028 = vpop.f32.mrb[0].mxu0
        %v2029 = vadd.f32 %v1916, %v2028
        %v2030 = vpop.f32.mrb[0].mxu0
        %v2031 = vadd.f32 %v1918, %v2030
        %2032 = vmatprep.mubr.bf16.mxu0 %v819
        %2033 = vmatmul.mubr.bf16.gmra.mrb[0].mxu0 %v818
        %v2034 = vpop.f32.mrb[0].mxu0
        %v2035 = vadd.f32 %v1922, %v2034
        %v2036 = vpop.f32.mrb[0].mxu0
        %v2037 = vadd.f32 %v1924, %v2036
        %v2038 = vpop.f32.mrb[0].mxu0
        %v2039 = vadd.f32 %v1926, %v2038
        %v2040 = vpop.f32.mrb[0].mxu0
        %v2041 = vadd.f32 %v1928, %v2040
        %2042 = vmatprep.mubr.bf16.mxu0 %v829
        %2043 = vmatmul.mubr.bf16.gmra.mrb[0].mxu0 %v828
        %v2044 = vpop.f32.mrb[0].mxu0
        %v2045 = vadd.f32 %v1932, %v2044
        %v2046 = vpop.f32.mrb[0].mxu0
        %v2047 = vadd.f32 %v1934, %v2046
        %v2048 = vpop.f32.mrb[0].mxu0
        %v2049 = vadd.f32 %v1936, %v2048
        %v2050 = vpop.f32.mrb[0].mxu0
        %v2051 = vadd.f32 %v1938, %v2050
        %2052 = vmatprep.mubr.bf16.mxu0 %v839
        %2053 = vmatmul.mubr.bf16.gmra.mrb[0].mxu0 %v838
        %v2054 = vpop.f32.mrb[0].mxu0
        %v2055 = vadd.f32 %v1942, %v2054
        %v2056 = vpop.f32.mrb[0].mxu0
        %v2057 = vadd.f32 %v1944, %v2056
        %v2058 = vpop.f32.mrb[0].mxu0
        %v2059 = vadd.f32 %v1946, %v2058
        %v2060 = vpop.f32.mrb[0].mxu0
        %v2061 = vadd.f32 %v1948, %v2060
        %2062 = vmatprep.mubr.bf16.mxu0 %v849
        %2063 = vmatmul.mubr.bf16.gmra.mrb[0].mxu0 %v848
        %v2064 = vpop.f32.mrb[0].mxu0
        %v2065 = vadd.f32 %v1952, %v2064
        %v2066 = vpop.f32.mrb[0].mxu0
        %v2067 = vadd.f32 %v1954, %v2066
        %v2068 = vpop.f32.mrb[0].mxu0
        %v2069 = vadd.f32 %v1956, %v2068
        %v2070 = vpop.f32.mrb[0].mxu0
        %v2071 = vadd.f32 %v1958, %v2070
        %2072 = vmatprep.mubr.bf16.mxu0 %v859
        %2073 = vmatmul.mubr.bf16.gmra.mrb[0].mxu0 %v858
        %v2074 = vpop.f32.mrb[0].mxu0
        %v2075 = vadd.f32 %v1962, %v2074
        %v2076 = vpop.f32.mrb[0].mxu0
        %v2077 = vadd.f32 %v1964, %v2076
        %v2078 = vpop.f32.mrb[0].mxu0
        %v2079 = vadd.f32 %v1966, %v2078
        %v2080 = vpop.f32.mrb[0].mxu0
        %v2081 = vadd.f32 %v1968, %v2080
        %2082 = vmatprep.mubr.bf16.mxu0 %v869
        %2083 = vmatmul.mubr.bf16.gmra.mrb[0].mxu0 %v868
        %v2084 = vpop.f32.mrb[0].mxu0
        %v2085 = vadd.f32 %v1972, %v2084
        %v2086 = vpop.f32.mrb[0].mxu0
        %v2087 = vadd.f32 %v1974, %v2086
        %v2088 = vpop.f32.mrb[0].mxu0
        %v2089 = vadd.f32 %v1976, %v2088
        %v2090 = vpop.f32.mrb[0].mxu0
        %v2091 = vadd.f32 %v1978, %v2090
        %2092 = vmatprep.mubr.bf16.mxu0 %v879
        %2093 = vmatmul.mubr.bf16.gmra.mrb[0].mxu0 %v878
        %v2094 = vpop.f32.mrb[0].mxu0
        %v2095 = vadd.f32 %v1982, %v2094
        %v2096 = vpop.f32.mrb[0].mxu0
        %v2097 = vadd.f32 %v1984, %v2096
        %v2098 = vpop.f32.mrb[0].mxu0
        %v2099 = vadd.f32 %v1986, %v2098
        %v2100 = vpop.f32.mrb[0].mxu0
        %v2101 = vadd.f32 %v1988, %v2100
        %2102 = vdwg.mxu0
        %2103 = vmatprep.subr.bf16.mxu0 %v1541
        %2104 = vmatpush1.bf16.msra.mxu0 %v1540
        %2105 = vmatprep.subr.bf16.mxu0 %v1543
        %2106 = vmatpush1.bf16.msra.mxu0 %v1542
        %2107 = vmatprep.subr.bf16.mxu0 %v1545
        %2108 = vmatpush1.bf16.msra.mxu0 %v1544
        %2109 = vmatprep.subr.bf16.mxu0 %v1547
        %2110 = vmatpush1.bf16.msra.mxu0 %v1546
        %2111 = vmatprep.subr.bf16.mxu0 %v1549
        %2112 = vmatpush1.bf16.msra.mxu0 %v1548
        %2113 = vmatprep.subr.bf16.mxu0 %v1551
        %2114 = vmatpush1.bf16.msra.mxu0 %v1550
        %2115 = vmatprep.subr.bf16.mxu0 %v1553
        %2116 = vmatpush1.bf16.msra.mxu0 %v1552
        %2117 = vmatprep.subr.bf16.mxu0 %v1555
        %2118 = vmatpush1.bf16.msra.mxu0 %v1554
        %2119 = vmatprep.subr.bf16.mxu0 %v1557
        %2120 = vmatpush1.bf16.msra.mxu0 %v1556
        %2121 = vmatprep.subr.bf16.mxu0 %v1559
        %2122 = vmatpush1.bf16.msra.mxu0 %v1558
        %2123 = vmatprep.subr.bf16.mxu0 %v1561
        %2124 = vmatpush1.bf16.msra.mxu0 %v1560
        %2125 = vmatprep.subr.bf16.mxu0 %v1563
        %2126 = vmatpush1.bf16.msra.mxu0 %v1562
        %2127 = vmatprep.subr.bf16.mxu0 %v1565
        %2128 = vmatpush1.bf16.msra.mxu0 %v1564
        %2129 = vmatprep.subr.bf16.mxu0 %v1567
        %2130 = vmatpush1.bf16.msra.mxu0 %v1566
        %2131 = vmatprep.subr.bf16.mxu0 %v1569
        %2132 = vmatpush1.bf16.msra.mxu0 %v1568
        %2133 = vmatprep.subr.bf16.mxu0 %v1571
        %2134 = vmatpush1.bf16.msra.mxu0 %v1570
        %2135 = vmatprep.mubr.bf16.mxu0 %v811
        %2136 = vmatmul.mubr.bf16.gmra.mrb[0].mxu0 %v810
        %v2137 = vpop.f32.mrb[0].mxu0
        %v2138 = vadd.f32 %v2025, %v2137
        %v2139 = vpop.f32.mrb[0].mxu0
        %v2140 = vadd.f32 %v2027, %v2139
        %v2141 = vpop.f32.mrb[0].mxu0
        %v2142 = vadd.f32 %v2029, %v2141
        %v2143 = vpop.f32.mrb[0].mxu0
        %v2144 = vadd.f32 %v2031, %v2143
        %2145 = vmatprep.mubr.bf16.mxu0 %v821
        %2146 = vmatmul.mubr.bf16.gmra.mrb[0].mxu0 %v820
        %v2147 = vpop.f32.mrb[0].mxu0
        %v2148 = vadd.f32 %v2035, %v2147
        %v2149 = vpop.f32.mrb[0].mxu0
        %v2150 = vadd.f32 %v2037, %v2149
        %v2151 = vpop.f32.mrb[0].mxu0
        %v2152 = vadd.f32 %v2039, %v2151
        %v2153 = vpop.f32.mrb[0].mxu0
        %v2154 = vadd.f32 %v2041, %v2153
        %2155 = vmatprep.mubr.bf16.mxu0 %v831
        %2156 = vmatmul.mubr.bf16.gmra.mrb[0].mxu0 %v830
        %v2157 = vpop.f32.mrb[0].mxu0
        %v2158 = vadd.f32 %v2045, %v2157
        %v2159 = vpop.f32.mrb[0].mxu0
        %v2160 = vadd.f32 %v2047, %v2159
        %v2161 = vpop.f32.mrb[0].mxu0
        %v2162 = vadd.f32 %v2049, %v2161
        %v2163 = vpop.f32.mrb[0].mxu0
        %v2164 = vadd.f32 %v2051, %v2163
        %2165 = vmatprep.mubr.bf16.mxu0 %v841
        %2166 = vmatmul.mubr.bf16.gmra.mrb[0].mxu0 %v840
        %v2167 = vpop.f32.mrb[0].mxu0
        %v2168 = vadd.f32 %v2055, %v2167
        %v2169 = vpop.f32.mrb[0].mxu0
        %v2170 = vadd.f32 %v2057, %v2169
        %v2171 = vpop.f32.mrb[0].mxu0
        %v2172 = vadd.f32 %v2059, %v2171
        %v2173 = vpop.f32.mrb[0].mxu0
        %v2174 = vadd.f32 %v2061, %v2173
        %2175 = vmatprep.mubr.bf16.mxu0 %v851
        %2176 = vmatmul.mubr.bf16.gmra.mrb[0].mxu0 %v850
        %v2177 = vpop.f32.mrb[0].mxu0
        %v2178 = vadd.f32 %v2065, %v2177
        %v2179 = vpop.f32.mrb[0].mxu0
        %v2180 = vadd.f32 %v2067, %v2179
        %v2181 = vpop.f32.mrb[0].mxu0
        %v2182 = vadd.f32 %v2069, %v2181
        %v2183 = vpop.f32.mrb[0].mxu0
        %v2184 = vadd.f32 %v2071, %v2183
        %2185 = vmatprep.mubr.bf16.mxu0 %v861
        %2186 = vmatmul.mubr.bf16.gmra.mrb[0].mxu0 %v860
        %v2187 = vpop.f32.mrb[0].mxu0
        %v2188 = vadd.f32 %v2075, %v2187
        %v2189 = vpop.f32.mrb[0].mxu0
        %v2190 = vadd.f32 %v2077, %v2189
        %v2191 = vpop.f32.mrb[0].mxu0
        %v2192 = vadd.f32 %v2079, %v2191
        %v2193 = vpop.f32.mrb[0].mxu0
        %v2194 = vadd.f32 %v2081, %v2193
        %2195 = vmatprep.mubr.bf16.mxu0 %v871
        %2196 = vmatmul.mubr.bf16.gmra.mrb[0].mxu0 %v870
        %v2197 = vpop.f32.mrb[0].mxu0
        %v2198 = vadd.f32 %v2085, %v2197
        %v2199 = vpop.f32.mrb[0].mxu0
        %v2200 = vadd.f32 %v2087, %v2199
        %v2201 = vpop.f32.mrb[0].mxu0
        %v2202 = vadd.f32 %v2089, %v2201
        %v2203 = vpop.f32.mrb[0].mxu0
        %v2204 = vadd.f32 %v2091, %v2203
        %2205 = vmatprep.mubr.bf16.mxu0 %v881
        %2206 = vmatmul.mubr.bf16.gmra.mrb[0].mxu0 %v880
        %v2207 = vpop.f32.mrb[0].mxu0
        %v2208 = vadd.f32 %v2095, %v2207
        %v2209 = vpop.f32.mrb[0].mxu0
        %v2210 = vadd.f32 %v2097, %v2209
        %v2211 = vpop.f32.mrb[0].mxu0
        %v2212 = vadd.f32 %v2099, %v2211
        %v2213 = vpop.f32.mrb[0].mxu0
        %v2214 = vadd.f32 %v2101, %v2213
        %2215 = vdwg.mxu0
        %2216 = vmatprep.subr.bf16.mxu0 %v1573
        %2217 = vmatpush1.bf16.msra.mxu0 %v1572
        %2218 = vmatprep.subr.bf16.mxu0 %v1575
        %2219 = vmatpush1.bf16.msra.mxu0 %v1574
        %2220 = vmatprep.subr.bf16.mxu0 %v1577
        %2221 = vmatpush1.bf16.msra.mxu0 %v1576
        %2222 = vmatprep.subr.bf16.mxu0 %v1579
        %2223 = vmatpush1.bf16.msra.mxu0 %v1578
        %2224 = vmatprep.subr.bf16.mxu0 %v1581
        %2225 = vmatpush1.bf16.msra.mxu0 %v1580
        %2226 = vmatprep.subr.bf16.mxu0 %v1583
        %2227 = vmatpush1.bf16.msra.mxu0 %v1582
        %2228 = vmatprep.subr.bf16.mxu0 %v1585
        %2229 = vmatpush1.bf16.msra.mxu0 %v1584
        %2230 = vmatprep.subr.bf16.mxu0 %v1587
        %2231 = vmatpush1.bf16.msra.mxu0 %v1586
        %2232 = vmatprep.subr.bf16.mxu0 %v1589
        %2233 = vmatpush1.bf16.msra.mxu0 %v1588
        %2234 = vmatprep.subr.bf16.mxu0 %v1591
        %2235 = vmatpush1.bf16.msra.mxu0 %v1590
        %2236 = vmatprep.subr.bf16.mxu0 %v1593
        %2237 = vmatpush1.bf16.msra.mxu0 %v1592
        %2238 = vmatprep.subr.bf16.mxu0 %v1595
        %2239 = vmatpush1.bf16.msra.mxu0 %v1594
        %2240 = vmatprep.subr.bf16.mxu0 %v1597
        %2241 = vmatpush1.bf16.msra.mxu0 %v1596
        %2242 = vmatprep.subr.bf16.mxu0 %v1599
        %2243 = vmatpush1.bf16.msra.mxu0 %v1598
        %2244 = vmatprep.subr.bf16.mxu0 %v1601
        %2245 = vmatpush1.bf16.msra.mxu0 %v1600
        %2246 = vmatprep.subr.bf16.mxu0 %v1603
        %2247 = vmatpush1.bf16.msra.mxu0 %v1602
        %2248 = vmatprep.mubr.bf16.mxu0 %v813
        %2249 = vmatmul.mubr.bf16.gmra.mrb[0].mxu0 %v812
        %v2250 = vpop.f32.mrb[0].mxu0
        %v2251 = vadd.f32 %v2138, %v2250
        %v2252 = vpop.f32.mrb[0].mxu0
        %v2253 = vadd.f32 %v2140, %v2252
        %v2254 = vpop.f32.mrb[0].mxu0
        %v2255 = vadd.f32 %v2142, %v2254
        %v2256 = vpop.f32.mrb[0].mxu0
        %v2257 = vadd.f32 %v2144, %v2256
        %2258 = vmatprep.mubr.bf16.mxu0 %v823
        %2259 = vmatmul.mubr.bf16.gmra.mrb[0].mxu0 %v822
        %v2260 = vpop.f32.mrb[0].mxu0
        %v2261 = vadd.f32 %v2148, %v2260
        %v2262 = vpop.f32.mrb[0].mxu0
        %v2263 = vadd.f32 %v2150, %v2262
        %v2264 = vpop.f32.mrb[0].mxu0
        %v2265 = vadd.f32 %v2152, %v2264
        %v2266 = vpop.f32.mrb[0].mxu0
        %v2267 = vadd.f32 %v2154, %v2266
        %2268 = vmatprep.mubr.bf16.mxu0 %v833
        %2269 = vmatmul.mubr.bf16.gmra.mrb[0].mxu0 %v832
        %v2270 = vpop.f32.mrb[0].mxu0
        %v2271 = vadd.f32 %v2158, %v2270
        %v2272 = vpop.f32.mrb[0].mxu0
        %v2273 = vadd.f32 %v2160, %v2272
        %v2274 = vpop.f32.mrb[0].mxu0
        %v2275 = vadd.f32 %v2162, %v2274
        %v2276 = vpop.f32.mrb[0].mxu0
        %v2277 = vadd.f32 %v2164, %v2276
        %2278 = vmatprep.mubr.bf16.mxu0 %v843
        %2279 = vmatmul.mubr.bf16.gmra.mrb[0].mxu0 %v842
        %v2280 = vpop.f32.mrb[0].mxu0
        %v2281 = vadd.f32 %v2168, %v2280
        %v2282 = vpop.f32.mrb[0].mxu0
        %v2283 = vadd.f32 %v2170, %v2282
        %v2284 = vpop.f32.mrb[0].mxu0
        %v2285 = vadd.f32 %v2172, %v2284
        %v2286 = vpop.f32.mrb[0].mxu0
        %v2287 = vadd.f32 %v2174, %v2286
        %2288 = vmatprep.mubr.bf16.mxu0 %v853
        %2289 = vmatmul.mubr.bf16.gmra.mrb[0].mxu0 %v852
        %v2290 = vpop.f32.mrb[0].mxu0
        %v2291 = vadd.f32 %v2178, %v2290
        %v2292 = vpop.f32.mrb[0].mxu0
        %v2293 = vadd.f32 %v2180, %v2292
        %v2294 = vpop.f32.mrb[0].mxu0
        %v2295 = vadd.f32 %v2182, %v2294
        %v2296 = vpop.f32.mrb[0].mxu0
        %v2297 = vadd.f32 %v2184, %v2296
        %2298 = vmatprep.mubr.bf16.mxu0 %v863
        %2299 = vmatmul.mubr.bf16.gmra.mrb[0].mxu0 %v862
        %v2300 = vpop.f32.mrb[0].mxu0
        %v2301 = vadd.f32 %v2188, %v2300
        %v2302 = vpop.f32.mrb[0].mxu0
        %v2303 = vadd.f32 %v2190, %v2302
        %v2304 = vpop.f32.mrb[0].mxu0
        %v2305 = vadd.f32 %v2192, %v2304
        %v2306 = vpop.f32.mrb[0].mxu0
        %v2307 = vadd.f32 %v2194, %v2306
        %2308 = vmatprep.mubr.bf16.mxu0 %v873
        %2309 = vmatmul.mubr.bf16.gmra.mrb[0].mxu0 %v872
        %v2310 = vpop.f32.mrb[0].mxu0
        %v2311 = vadd.f32 %v2198, %v2310
        %v2312 = vpop.f32.mrb[0].mxu0
        %v2313 = vadd.f32 %v2200, %v2312
        %v2314 = vpop.f32.mrb[0].mxu0
        %v2315 = vadd.f32 %v2202, %v2314
        %v2316 = vpop.f32.mrb[0].mxu0
        %v2317 = vadd.f32 %v2204, %v2316
        %2318 = vmatprep.mubr.bf16.mxu0 %v883
        %2319 = vmatmul.mubr.bf16.gmra.mrb[0].mxu0 %v882
        %v2320 = vpop.f32.mrb[0].mxu0
        %v2321 = vadd.f32 %v2208, %v2320
        %v2322 = vpop.f32.mrb[0].mxu0
        %v2323 = vadd.f32 %v2210, %v2322
        %v2324 = vpop.f32.mrb[0].mxu0
        %v2325 = vadd.f32 %v2212, %v2324
        %v2326 = vpop.f32.mrb[0].mxu0
        %v2327 = vadd.f32 %v2214, %v2326
        %2328 = vdwg.mxu0
        %v2329 = vadd.f32 %v292, %v2251
        %v2330 = vadd.f32 %v293, %v2253
        %v2331 = vadd.f32 %v294, %v2255
        %v2332 = vadd.f32 %v295, %v2257
        %v2333 = vadd.f32 %v296, %v2261
        %v2334 = vadd.f32 %v297, %v2263
        %v2335 = vadd.f32 %v298, %v2265
        %v2336 = vadd.f32 %v299, %v2267
        %v2337 = vadd.f32 %v300, %v2271
        %v2338 = vadd.f32 %v301, %v2273
        %v2339 = vadd.f32 %v302, %v2275
        %v2340 = vadd.f32 %v303, %v2277
        %v2341 = vadd.f32 %v304, %v2281
        %v2342 = vadd.f32 %v305, %v2283
        %v2343 = vadd.f32 %v306, %v2285
        %v2344 = vadd.f32 %v307, %v2287
        %v2345 = vadd.f32 %v308, %v2291
        %v2346 = vadd.f32 %v309, %v2293
        %v2347 = vadd.f32 %v310, %v2295
        %v2348 = vadd.f32 %v311, %v2297
        %v2349 = vadd.f32 %v312, %v2301
        %v2350 = vadd.f32 %v313, %v2303
        %v2351 = vadd.f32 %v314, %v2305
        %v2352 = vadd.f32 %v315, %v2307
        %v2353 = vadd.f32 %v316, %v2311
        %v2354 = vadd.f32 %v317, %v2313
        %v2355 = vadd.f32 %v318, %v2315
        %v2356 = vadd.f32 %v319, %v2317
        %v2357 = vadd.f32 %v320, %v2321
        %v2358 = vadd.f32 %v321, %v2323
        %v2359 = vadd.f32 %v322, %v2325
        %v2360 = vadd.f32 %v323, %v2327
        %2361 = vst [vmem:[#allocation2] sm:$0xff] %v2329
        %2362 = vst [vmem:[#allocation2 + $0x8] sm:$0xff] %v2330
        %2363 = vst [vmem:[#allocation2 + $0x10] sm:$0xff] %v2331
        %2364 = vst [vmem:[#allocation2 + $0x18] sm:$0xff] %v2332
        %2365 = vst [vmem:[#allocation2 + $0x20] sm:$0xff] %v2333
        %2366 = vst [vmem:[#allocation2 + $0x28] sm:$0xff] %v2334
        %2367 = vst [vmem:[#allocation2 + $0x30] sm:$0xff] %v2335
        %2368 = vst [vmem:[#allocation2 + $0x38] sm:$0xff] %v2336
        %2369 = vst [vmem:[#allocation2 + $0x40] sm:$0xff] %v2337
        %2370 = vst [vmem:[#allocation2 + $0x48] sm:$0xff] %v2338
        %2371 = vst [vmem:[#allocation2 + $0x50] sm:$0xff] %v2339
        %2372 = vst [vmem:[#allocation2 + $0x58] sm:$0xff] %v2340
        %2373 = vst [vmem:[#allocation2 + $0x60] sm:$0xff] %v2341
        %2374 = vst [vmem:[#allocation2 + $0x68] sm:$0xff] %v2342
        %2375 = vst [vmem:[#allocation2 + $0x70] sm:$0xff] %v2343
        %2376 = vst [vmem:[#allocation2 + $0x78] sm:$0xff] %v2344
        %2377 = vst [vmem:[#allocation2 + $0x80] sm:$0xff] %v2345
        %2378 = vst [vmem:[#allocation2 + $0x88] sm:$0xff] %v2346
        %2379 = vst [vmem:[#allocation2 + $0x90] sm:$0xff] %v2347
        %2380 = vst [vmem:[#allocation2 + $0x98] sm:$0xff] %v2348
        %2381 = vst [vmem:[#allocation2 + $0xa0] sm:$0xff] %v2349
        %2382 = vst [vmem:[#allocation2 + $0xa8] sm:$0xff] %v2350
        %2383 = vst [vmem:[#allocation2 + $0xb0] sm:$0xff] %v2351
        %2384 = vst [vmem:[#allocation2 + $0xb8] sm:$0xff] %v2352
        %2385 = vst [vmem:[#allocation2 + $0xc0] sm:$0xff] %v2353
        %2386 = vst [vmem:[#allocation2 + $0xc8] sm:$0xff] %v2354
        %2387 = vst [vmem:[#allocation2 + $0xd0] sm:$0xff] %v2355
        %2388 = vst [vmem:[#allocation2 + $0xd8] sm:$0xff] %v2356
        %2389 = vst [vmem:[#allocation2 + $0xe0] sm:$0xff] %v2357
        %2390 = vst [vmem:[#allocation2 + $0xe8] sm:$0xff] %v2358
        %2391 = vst [vmem:[#allocation2 + $0xf0] sm:$0xff] %v2359
        %2392 = vst [vmem:[#allocation2 + $0xf8] sm:$0xff] %v2360
        %p2393 = scmp.eq.s32.totalorder %s26, 2
        // Predicated region
        $region49: #{tpu_custom_call.1} parent=31 // pred_check
          %p2394 = pneg %p2393
        $region50: #{tpu_custom_call.1} parent=31 // pred_check_branch
          %2396 = sbr.rel (%p2394) target = $region52
        $region51: #{tpu_custom_call.1} parent=31 // pred_region
          %v2397 = vld [vmem:[#allocation2] sm:$0xff]
          %v2398 = vld [vmem:[#allocation2 + $0x8] sm:$0xff]
          %v2399 = vld [vmem:[#allocation2 + $0x10] sm:$0xff]
          %v2400 = vld [vmem:[#allocation2 + $0x18] sm:$0xff]
          %v2401 = vld [vmem:[#allocation2 + $0x20] sm:$0xff]
          %v2402 = vld [vmem:[#allocation2 + $0x28] sm:$0xff]
          %v2403 = vld [vmem:[#allocation2 + $0x30] sm:$0xff]
          %v2404 = vld [vmem:[#allocation2 + $0x38] sm:$0xff]
          %v2405 = vld [vmem:[#allocation2 + $0x40] sm:$0xff]
          %v2406 = vld [vmem:[#allocation2 + $0x48] sm:$0xff]
          %v2407 = vld [vmem:[#allocation2 + $0x50] sm:$0xff]
          %v2408 = vld [vmem:[#allocation2 + $0x58] sm:$0xff]
          %v2409 = vld [vmem:[#allocation2 + $0x60] sm:$0xff]
          %v2410 = vld [vmem:[#allocation2 + $0x68] sm:$0xff]
          %v2411 = vld [vmem:[#allocation2 + $0x70] sm:$0xff]
          %v2412 = vld [vmem:[#allocation2 + $0x78] sm:$0xff]
          %v2413 = vld [vmem:[#allocation2 + $0x80] sm:$0xff]
          %v2414 = vld [vmem:[#allocation2 + $0x88] sm:$0xff]
          %v2415 = vld [vmem:[#allocation2 + $0x90] sm:$0xff]
          %v2416 = vld [vmem:[#allocation2 + $0x98] sm:$0xff]
          %v2417 = vld [vmem:[#allocation2 + $0xa0] sm:$0xff]
          %v2418 = vld [vmem:[#allocation2 + $0xa8] sm:$0xff]
          %v2419 = vld [vmem:[#allocation2 + $0xb0] sm:$0xff]
          %v2420 = vld [vmem:[#allocation2 + $0xb8] sm:$0xff]
          %v2421 = vld [vmem:[#allocation2 + $0xc0] sm:$0xff]
          %v2422 = vld [vmem:[#allocation2 + $0xc8] sm:$0xff]
          %v2423 = vld [vmem:[#allocation2 + $0xd0] sm:$0xff]
          %v2424 = vld [vmem:[#allocation2 + $0xd8] sm:$0xff]
          %v2425 = vld [vmem:[#allocation2 + $0xe0] sm:$0xff]
          %v2426 = vld [vmem:[#allocation2 + $0xe8] sm:$0xff]
          %v2427 = vld [vmem:[#allocation2 + $0xf0] sm:$0xff]
          %v2428 = vld [vmem:[#allocation2 + $0xf8] sm:$0xff]
          %v2429 = vld [vmem:[#allocation8] sm:$0x3]
          %v2431 = vlaneseq
          %v2432 = vshrl.u32 %v2431, 7
          %v2433 = vsub.s32 0, %v2432
          %v2434 = vrot.slane %v2429, %v2433
          %v2435 = vlaneseq
          %v2436 = vshrl.u32 %v2435, 7
          %v2437 = vsub.s32 1, %v2436
          %v2438 = vrot.slane %v2429, %v2437
          %v2441 = vadd.f32 %v2397, %v2434
          %v2442 = vadd.f32 %v2398, %v2438
          %v2443 = vadd.f32 %v2399, %v2434
          %v2444 = vadd.f32 %v2400, %v2438
          %v2445 = vadd.f32 %v2401, %v2434
          %v2446 = vadd.f32 %v2402, %v2438
          %v2447 = vadd.f32 %v2403, %v2434
          %v2448 = vadd.f32 %v2404, %v2438
          %v2449 = vadd.f32 %v2405, %v2434
          %v2450 = vadd.f32 %v2406, %v2438
          %v2451 = vadd.f32 %v2407, %v2434
          %v2452 = vadd.f32 %v2408, %v2438
          %v2453 = vadd.f32 %v2409, %v2434
          %v2454 = vadd.f32 %v2410, %v2438
          %v2455 = vadd.f32 %v2411, %v2434
          %v2456 = vadd.f32 %v2412, %v2438
          %v2457 = vadd.f32 %v2413, %v2434
          %v2458 = vadd.f32 %v2414, %v2438
          %v2459 = vadd.f32 %v2415, %v2434
          %v2460 = vadd.f32 %v2416, %v2438
          %v2461 = vadd.f32 %v2417, %v2434
          %v2462 = vadd.f32 %v2418, %v2438
          %v2463 = vadd.f32 %v2419, %v2434
          %v2464 = vadd.f32 %v2420, %v2438
          %v2465 = vadd.f32 %v2421, %v2434
          %v2466 = vadd.f32 %v2422, %v2438
          %v2467 = vadd.f32 %v2423, %v2434
          %v2468 = vadd.f32 %v2424, %v2438
          %v2469 = vadd.f32 %v2425, %v2434
          %v2470 = vadd.f32 %v2426, %v2438
          %v2471 = vadd.f32 %v2427, %v2434
          %v2472 = vadd.f32 %v2428, %v2438
          %v2473 = vmax.f32 %v2441, 0.0
          %v2474 = vmax.f32 %v2442, 0.0
          %v2475 = vmax.f32 %v2443, 0.0
          %v2476 = vmax.f32 %v2444, 0.0
          %v2477 = vmax.f32 %v2445, 0.0
          %v2478 = vmax.f32 %v2446, 0.0
          %v2479 = vmax.f32 %v2447, 0.0
          %v2480 = vmax.f32 %v2448, 0.0
          %v2481 = vmax.f32 %v2449, 0.0
          %v2482 = vmax.f32 %v2450, 0.0
          %v2483 = vmax.f32 %v2451, 0.0
          %v2484 = vmax.f32 %v2452, 0.0
          %v2485 = vmax.f32 %v2453, 0.0
          %v2486 = vmax.f32 %v2454, 0.0
          %v2487 = vmax.f32 %v2455, 0.0
          %v2488 = vmax.f32 %v2456, 0.0
          %v2489 = vmax.f32 %v2457, 0.0
          %v2490 = vmax.f32 %v2458, 0.0
          %v2491 = vmax.f32 %v2459, 0.0
          %v2492 = vmax.f32 %v2460, 0.0
          %v2493 = vmax.f32 %v2461, 0.0
          %v2494 = vmax.f32 %v2462, 0.0
          %v2495 = vmax.f32 %v2463, 0.0
          %v2496 = vmax.f32 %v2464, 0.0
          %v2497 = vmax.f32 %v2465, 0.0
          %v2498 = vmax.f32 %v2466, 0.0
          %v2499 = vmax.f32 %v2467, 0.0
          %v2500 = vmax.f32 %v2468, 0.0
          %v2501 = vmax.f32 %v2469, 0.0
          %v2502 = vmax.f32 %v2470, 0.0
          %v2503 = vmax.f32 %v2471, 0.0
          %v2504 = vmax.f32 %v2472, 0.0
          %v2505 = vpack.c.bf16 %v2475, %v2473
          %v2506 = vpack.c.bf16 %v2476, %v2474
          %v2507 = vpack.c.bf16 %v2479, %v2477
          %v2508 = vpack.c.bf16 %v2480, %v2478
          %v2509 = vpack.c.bf16 %v2483, %v2481
          %v2510 = vpack.c.bf16 %v2484, %v2482
          %v2511 = vpack.c.bf16 %v2487, %v2485
          %v2512 = vpack.c.bf16 %v2488, %v2486
          %v2513 = vpack.c.bf16 %v2491, %v2489
          %v2514 = vpack.c.bf16 %v2492, %v2490
          %v2515 = vpack.c.bf16 %v2495, %v2493
          %v2516 = vpack.c.bf16 %v2496, %v2494
          %v2517 = vpack.c.bf16 %v2499, %v2497
          %v2518 = vpack.c.bf16 %v2500, %v2498
          %v2519 = vpack.c.bf16 %v2503, %v2501
          %v2520 = vpack.c.bf16 %v2504, %v2502
          %v2537 = vunpack.c.l.b16 %v2505
          %v2538 = vunpack.c.l.b16 %v2506
          %v2539 = vunpack.c.h.b16 %v2505
          %v2540 = vunpack.c.h.b16 %v2506
          %v2541 = vunpack.c.l.b16 %v2507
          %v2542 = vunpack.c.l.b16 %v2508
          %v2543 = vunpack.c.h.b16 %v2507
          %v2544 = vunpack.c.h.b16 %v2508
          %v2545 = vunpack.c.l.b16 %v2509
          %v2546 = vunpack.c.l.b16 %v2510
          %v2547 = vunpack.c.h.b16 %v2509
          %v2548 = vunpack.c.h.b16 %v2510
          %v2549 = vunpack.c.l.b16 %v2511
          %v2550 = vunpack.c.l.b16 %v2512
          %v2551 = vunpack.c.h.b16 %v2511
          %v2552 = vunpack.c.h.b16 %v2512
          %v2553 = vunpack.c.l.b16 %v2513
          %v2554 = vunpack.c.l.b16 %v2514
          %v2555 = vunpack.c.h.b16 %v2513
          %v2556 = vunpack.c.h.b16 %v2514
          %v2557 = vunpack.c.l.b16 %v2515
          %v2558 = vunpack.c.l.b16 %v2516
          %v2559 = vunpack.c.h.b16 %v2515
          %v2560 = vunpack.c.h.b16 %v2516
          %v2561 = vunpack.c.l.b16 %v2517
          %v2562 = vunpack.c.l.b16 %v2518
          %v2563 = vunpack.c.h.b16 %v2517
          %v2564 = vunpack.c.h.b16 %v2518
          %v2565 = vunpack.c.l.b16 %v2519
          %v2566 = vunpack.c.l.b16 %v2520
          %v2567 = vunpack.c.h.b16 %v2519
          %v2568 = vunpack.c.h.b16 %v2520
          %v2569 = vpack.c.b16 %v2538, %v2537
          %v2570 = vpack.c.b16 %v2540, %v2539
          %v2571 = vpack.c.b16 %v2542, %v2541
          %v2572 = vpack.c.b16 %v2544, %v2543
          %v2573 = vpack.c.b16 %v2546, %v2545
          %v2574 = vpack.c.b16 %v2548, %v2547
          %v2575 = vpack.c.b16 %v2550, %v2549
          %v2576 = vpack.c.b16 %v2552, %v2551
          %v2577 = vpack.c.b16 %v2554, %v2553
          %v2578 = vpack.c.b16 %v2556, %v2555
          %v2579 = vpack.c.b16 %v2558, %v2557
          %v2580 = vpack.c.b16 %v2560, %v2559
          %v2581 = vpack.c.b16 %v2562, %v2561
          %v2582 = vpack.c.b16 %v2564, %v2563
          %v2583 = vpack.c.b16 %v2566, %v2565
          %v2584 = vpack.c.b16 %v2568, %v2567
          %2601 = vst [vmem:[#allocation9] sm:$0xff] %v2569
          %2602 = vst [vmem:[#allocation9 + $0x8] sm:$0xff] %v2570
          %2603 = vst [vmem:[#allocation9 + $0x10] sm:$0xff] %v2571
          %2604 = vst [vmem:[#allocation9 + $0x18] sm:$0xff] %v2572
          %2605 = vst [vmem:[#allocation9 + $0x20] sm:$0xff] %v2573
          %2606 = vst [vmem:[#allocation9 + $0x28] sm:$0xff] %v2574
          %2607 = vst [vmem:[#allocation9 + $0x30] sm:$0xff] %v2575
          %2608 = vst [vmem:[#allocation9 + $0x38] sm:$0xff] %v2576
          %2609 = vst [vmem:[#allocation9 + $0x40] sm:$0xff] %v2577
          %2610 = vst [vmem:[#allocation9 + $0x48] sm:$0xff] %v2578
          %2611 = vst [vmem:[#allocation9 + $0x50] sm:$0xff] %v2579
          %2612 = vst [vmem:[#allocation9 + $0x58] sm:$0xff] %v2580
          %2613 = vst [vmem:[#allocation9 + $0x60] sm:$0xff] %v2581
          %2614 = vst [vmem:[#allocation9 + $0x68] sm:$0xff] %v2582
          %2615 = vst [vmem:[#allocation9 + $0x70] sm:$0xff] %v2583
          %2616 = vst [vmem:[#allocation9 + $0x78] sm:$0xff] %v2584
        $region52: #{tpu_custom_call.1} parent=31 // pred_fallthru
          _
        // Predicated region
        $region53: #{tpu_custom_call.1} parent=31 // pred_check
          %p2617 = pneg %p126
        $region54: #{tpu_custom_call.1} parent=31 // pred_check_branch
          %2619 = sbr.rel (%p2617) target = $region56
        $region55: #{tpu_custom_call.1} parent=31 // pred_region
          %s2620 = smul.u32 16, %s25
          %s2622 = ssub.s32 2048, 2048
          %2623 = vsyncadd [#allocation5], %s2622
          %s2624 = smul.addr %s2620, 2
          %s2625 = smul.addr %s2624, 64
          %s2626 = scalar_lea.hbm %s3, %s2625
          %s2627 = sshll.u32 [#allocation9], 4
          %s2628 = int_to_ptr.vmem [resolvable:$true] %s2627
          %2633 = dma.vmem_to_hbm [thread:$0]  %s2628, 2048, %s2626, [#allocation5], 128, 128, 8
        $region56: #{tpu_custom_call.1} parent=31 // pred_fallthru
          _
        // Predicated region
        $region57: #{tpu_custom_call.1} parent=31 // pred_check
          %p2634 = pneg %p126
        $region58: #{tpu_custom_call.1} parent=31 // pred_check_branch
          %2636 = sbr.rel (%p2634) target = $region60
        $region59: #{tpu_custom_call.1} parent=31 // pred_region
          %2637 = dma.done [#allocation5], 2048
        $region60: #{tpu_custom_call.1} parent=31 // pred_fallthru
          _
      $region32: #{tpu_custom_call.1} parent=5 // pred_fallthru
        _
      %p2638 = scmp.le.s32.totalorder 2, %s16
      // Predicated region
      $region61: #{tpu_custom_call.1} parent=5 // pred_check
        %p2639 = pneg %p2638
      $region62: #{tpu_custom_call.1} parent=5 // pred_check_branch
        %2641 = sbr.rel (%p2639) target = $region64
      $region63: #{tpu_custom_call.1} parent=5 // pred_region
        %s2642 = ssub.s32 %s16, 2
      $region64: #{tpu_custom_call.1} parent=5 // pred_fallthru
        _
    $region6: #{tpu_custom_call.1} parent=1 // loop_footer
      %s20 = sadd.s32 1, %s16
    $region7: #{tpu_custom_call.1} parent=1 // loop_footer_branch
      %15 = sbr.rel target = $region3
    $region8: #{tpu_custom_call.1} parent=1 // loop_exit
      _
    %2643 = vsyncpa [#allocation4], 1
    %s2644 = scalar_lea.sflag [#allocation4], 1
    %2645 = vsyncpa %s2644, 1
    %2646 = vsyncpa [#allocation7], 1
    %s2647 = scalar_lea.sflag [#allocation7], 1
    %2648 = vsyncpa %s2647, 1
    %2649 = vsyncpa [#allocation5], 1
    %s2650 = scalar_lea.sflag [#allocation5], 1
    %2651 = vsyncpa %s2650, 1

</llo_original>
